<compile_context>
chip_gen: v7x
topology: tpu7x:2x2x1
jax: 0.10.0
libtpu: 0.0.40
codegen_flags: <defaults>
</compile_context>

<pallas_src>
import functools

import jax
import jax.numpy as jnp
from jax import lax
from jax.experimental import pallas as pl
from jax.experimental.pallas import tpu as pltpu

EPS = 1e-5


def _fused_conv_bn_kernel(x_ref, w_ref, g_ref, b_ref, o_ref, *, eps):
    """Fully fused 1x1-conv + training-mode BatchNorm2d.

    x_ref: (N, Cin, HW)  input activations (VMEM, whole array)
    w_ref: (Cout, Cin)   conv weight (float32)
    g_ref: (Cout, 1)     BN gamma
    b_ref: (Cout, 1)     BN beta
    o_ref: (N, Cout, HW) output (float32, NCHW with HW on the lane axis)
    """
    n_imgs = x_ref.shape[0]
    hw = x_ref.shape[2]
    cout = w_ref.shape[0]

    w = w_ref[...].astype(jnp.float32)                      # (Cout, Cin)

    # ---- Pass A: raw conv output y = W @ x into o_ref (VMEM staging), ----
    # ----         accumulating the per-channel sum for the batch mean.  ----
    ysum = jnp.zeros((cout, 1), jnp.float32)
    for n in range(n_imgs):                                  # static unroll (N small)
        y = jnp.dot(w, x_ref[n].astype(jnp.float32),
                    preferred_element_type=jnp.float32)      # (Cout, HW)
        o_ref[n] = y
        ysum = ysum + jnp.sum(y, axis=1, keepdims=True)

    m = jnp.float32(n_imgs * hw)
    mean = ysum / m                                          # (Cout, 1)

    # ---- Pass B: exact two-pass (centered) biased variance over N*HW. ----
    vsum = jnp.zeros((cout, 1), jnp.float32)
    for n in range(n_imgs):
        d = o_ref[n] - mean
        vsum = vsum + jnp.sum(d * d, axis=1, keepdims=True)
    var = vsum / m
    inv_std = lax.rsqrt(var + jnp.float32(eps))

    scale = g_ref[...].astype(jnp.float32) * inv_std         # (Cout, 1)
    bias = b_ref[...].astype(jnp.float32) - mean * scale     # (Cout, 1)

    # ---- Pass C: normalize + affine in place (lane-dense stores). ----
    for n in range(n_imgs):
        o_ref[n] = (o_ref[n] * scale + bias).astype(o_ref.dtype)


def conv1x1_batchnorm(x_nchw, weight, gamma, beta, eps=EPS):
    """1x1 conv (no bias) + BatchNorm2d training-mode forward, fully fused.

    x_nchw: (N, Cin, H, W); weight: (Cout, Cin) (from PyTorch (Cout, Cin, 1, 1));
    gamma/beta: (Cout,).  Returns (N, Cout, H, W) float32.
    """
    N, Cin, H, W = x_nchw.shape
    Cout = weight.shape[0]
    HW = H * W
    x3 = x_nchw.reshape(N, Cin, HW)          # free reshape, no transpose

    vmem_spec = pl.BlockSpec(memory_space=pltpu.MemorySpace.VMEM)
    out3 = pl.pallas_call(
        functools.partial(_fused_conv_bn_kernel, eps=eps),
        out_shape=jax.ShapeDtypeStruct((N, Cout, HW), jnp.float32),
        in_specs=[vmem_spec, vmem_spec, vmem_spec, vmem_spec],
        out_specs=vmem_spec,
    )(
        x3,
        weight.astype(jnp.float32),
        gamma.reshape(Cout, 1).astype(jnp.float32),
        beta.reshape(Cout, 1).astype(jnp.float32),
    )

    return out3.reshape(N, Cout, H, W)


def reference(x_nchw, weight, gamma, beta, eps=EPS):
    # Pure-JAX reference: 1x1 conv then training-mode BatchNorm2d.
    y = jnp.einsum('oc,nchw->nohw', weight, x_nchw,
                   precision=lax.Precision.HIGHEST)
    mean = jnp.mean(y, axis=(0, 2, 3), keepdims=True)
    var = jnp.mean((y - mean) ** 2, axis=(0, 2, 3), keepdims=True)
    return ((y - mean) / jnp.sqrt(var + eps)
            * gamma.reshape(1, -1, 1, 1) + beta.reshape(1, -1, 1, 1))


if __name__ == "__main__":
    key = jax.random.PRNGKey(0)
    k_x, k_w, k_g, k_b = jax.random.split(key, 4)

    # Small shapes consistent with the module: Cin=24, Cout=72, 28x28 spatial.
    N, Cin, H, W = 2, 24, 28, 28
    Cout = 72

    x = jax.random.normal(k_x, (N, Cin, H, W), dtype=jnp.float32)
    # Conv2d(24, 72, kernel_size=1, bias=False): weight (72, 24, 1, 1) -> (72, 24)
    weight = jax.random.normal(k_w, (Cout, Cin), dtype=jnp.float32) * 0.1
    # BatchNorm2d(72) affine params (deterministic, non-trivial)
    gamma = 1.0 + 0.1 * jax.random.normal(k_g, (Cout,), dtype=jnp.float32)
    beta = 0.1 * jax.random.normal(k_b, (Cout,), dtype=jnp.float32)

    out = conv1x1_batchnorm(x, weight, gamma, beta)
    out = jax.block_until_ready(out)

    ref = reference(x, weight, gamma, beta)
    assert out.shape == (N, Cout, H, W)
    max_err = float(jnp.max(jnp.abs(out - ref)))
    assert jnp.allclose(out, ref, atol=2e-4, rtol=2e-4), f"max abs err {max_err}"

    print("KERNEL_OK")
</pallas_src>

<mosaic_0001>
module attributes {stable_mosaic.version = 11 : i64} {
  func.func @_fused_conv_bn_kernel(%arg0: memref<2x24x784xf32, #tpu.memory_space<vmem>>, %arg1: memref<72x24xf32, #tpu.memory_space<vmem>>, %arg2: memref<72x1xf32, #tpu.memory_space<vmem>>, %arg3: memref<72x1xf32, #tpu.memory_space<vmem>>, %arg4: memref<2x72x784xf32, #tpu.memory_space<vmem>>) attributes {dimension_semantics = [], scalar_prefetch = 0 : i64, scratch_operands = 0 : i64, tpu.core_type = #tpu.core_type<tc>} {
    %c0 = arith.constant 0 : index
    %c0_0 = arith.constant 0 : index
    %0 = vector.load %arg1[%c0, %c0_0] : memref<72x24xf32, #tpu.memory_space<vmem>>, vector<72x24xf32>
    %cst = arith.constant 0.000000e+00 : f32
    %1 = vector.broadcast %cst : f32 to vector<72x1xf32>
    %c0_1 = arith.constant 0 : index
    %c0_2 = arith.constant 0 : index
    %c0_3 = arith.constant 0 : index
    %2 = vector.load %arg0[%c0_1, %c0_2, %c0_3] : memref<2x24x784xf32, #tpu.memory_space<vmem>>, vector<1x24x784xf32>
    %3 = vector.shape_cast %2 : vector<1x24x784xf32> to vector<24x784xf32>
    %cst_4 = arith.constant dense<0.000000e+00> : vector<72x784xf32>
    %4 = tpu.matmul %0, %3, %cst_4 {dimension_numbers = #tpu.dot_dimension_numbers<[1], [0], [0], [1], [0, 0, 1, 1], [], []>} : vector<72x24xf32>, vector<24x784xf32>, vector<72x784xf32> -> vector<72x784xf32>
    %c0_5 = arith.constant 0 : index
    %c0_6 = arith.constant 0 : index
    %c0_7 = arith.constant 0 : index
    %5 = vector.load %arg4[%c0_5, %c0_6, %c0_7] : memref<2x72x784xf32, #tpu.memory_space<vmem>>, vector<1x72x784xf32>
    %6 = vector.shape_cast %5 : vector<1x72x784xf32> to vector<72x784xf32>
    %7 = vector.shape_cast %4 : vector<72x784xf32> to vector<1x72x784xf32>
    tpu.vector_store %arg4[%c0_5, %c0_6, %c0_7], %7 {strides = array<i32>} : memref<2x72x784xf32, #tpu.memory_space<vmem>>, vector<1x72x784xf32>,
    %cst_8 = arith.constant dense<0.000000e+00> : vector<72xf32>
    %8 = vector.multi_reduction <add>, %4, %cst_8 [1] : vector<72x784xf32> to vector<72xf32>
    %9 = vector.shape_cast %8 : vector<72xf32> to vector<72x1xf32>
    %10 = arith.addf %1, %9 : vector<72x1xf32>
    %c1 = arith.constant 1 : index
    %c0_9 = arith.constant 0 : index
    %c0_10 = arith.constant 0 : index
    %11 = vector.load %arg0[%c1, %c0_9, %c0_10] : memref<2x24x784xf32, #tpu.memory_space<vmem>>, vector<1x24x784xf32>
    %12 = vector.shape_cast %11 : vector<1x24x784xf32> to vector<24x784xf32>
    %cst_11 = arith.constant dense<0.000000e+00> : vector<72x784xf32>
    %13 = tpu.matmul %0, %12, %cst_11 {dimension_numbers = #tpu.dot_dimension_numbers<[1], [0], [0], [1], [0, 0, 1, 1], [], []>} : vector<72x24xf32>, vector<24x784xf32>, vector<72x784xf32> -> vector<72x784xf32>
    %c1_12 = arith.constant 1 : index
    %c0_13 = arith.constant 0 : index
    %c0_14 = arith.constant 0 : index
    %14 = vector.load %arg4[%c1_12, %c0_13, %c0_14] : memref<2x72x784xf32, #tpu.memory_space<vmem>>, vector<1x72x784xf32>
    %15 = vector.shape_cast %14 : vector<1x72x784xf32> to vector<72x784xf32>
    %16 = vector.shape_cast %13 : vector<72x784xf32> to vector<1x72x784xf32>
    tpu.vector_store %arg4[%c1_12, %c0_13, %c0_14], %16 {strides = array<i32>} : memref<2x72x784xf32, #tpu.memory_space<vmem>>, vector<1x72x784xf32>,
    %cst_15 = arith.constant dense<0.000000e+00> : vector<72xf32>
    %17 = vector.multi_reduction <add>, %13, %cst_15 [1] : vector<72x784xf32> to vector<72xf32>
    %18 = vector.shape_cast %17 : vector<72xf32> to vector<72x1xf32>
    %19 = arith.addf %10, %18 : vector<72x1xf32>
    %cst_16 = arith.constant 1.568000e+03 : f32
    %20 = vector.broadcast %cst_16 : f32 to vector<72x1xf32>
    %21 = arith.divf %19, %20 : vector<72x1xf32>
    %cst_17 = arith.constant 0.000000e+00 : f32
    %22 = vector.broadcast %cst_17 : f32 to vector<72x1xf32>
    %c0_18 = arith.constant 0 : index
    %c0_19 = arith.constant 0 : index
    %c0_20 = arith.constant 0 : index
    %23 = vector.load %arg4[%c0_18, %c0_19, %c0_20] : memref<2x72x784xf32, #tpu.memory_space<vmem>>, vector<1x72x784xf32>
    %24 = vector.shape_cast %23 : vector<1x72x784xf32> to vector<72x784xf32>
    %25 = vector.broadcast %21 : vector<72x1xf32> to vector<72x784xf32>
    %26 = arith.subf %24, %25 : vector<72x784xf32>
    %27 = arith.mulf %26, %26 : vector<72x784xf32>
    %cst_21 = arith.constant dense<0.000000e+00> : vector<72xf32>
    %28 = vector.multi_reduction <add>, %27, %cst_21 [1] : vector<72x784xf32> to vector<72xf32>
    %29 = vector.shape_cast %28 : vector<72xf32> to vector<72x1xf32>
    %30 = arith.addf %22, %29 : vector<72x1xf32>
    %c1_22 = arith.constant 1 : index
    %c0_23 = arith.constant 0 : index
    %c0_24 = arith.constant 0 : index
    %31 = vector.load %arg4[%c1_22, %c0_23, %c0_24] : memref<2x72x784xf32, #tpu.memory_space<vmem>>, vector<1x72x784xf32>
    %32 = vector.shape_cast %31 : vector<1x72x784xf32> to vector<72x784xf32>
    %33 = vector.broadcast %21 : vector<72x1xf32> to vector<72x784xf32>
    %34 = arith.subf %32, %33 : vector<72x784xf32>
    %35 = arith.mulf %34, %34 : vector<72x784xf32>
    %cst_25 = arith.constant dense<0.000000e+00> : vector<72xf32>
    %36 = vector.multi_reduction <add>, %35, %cst_25 [1] : vector<72x784xf32> to vector<72xf32>
    %37 = vector.shape_cast %36 : vector<72xf32> to vector<72x1xf32>
    %38 = arith.addf %30, %37 : vector<72x1xf32>
    %cst_26 = arith.constant 1.568000e+03 : f32
    %39 = vector.broadcast %cst_26 : f32 to vector<72x1xf32>
    %40 = arith.divf %38, %39 : vector<72x1xf32>
    %cst_27 = arith.constant 9.99999974E-6 : f32
    %41 = vector.broadcast %cst_27 : f32 to vector<72x1xf32>
    %42 = arith.addf %40, %41 : vector<72x1xf32>
    %43 = math.rsqrt %42 : vector<72x1xf32>
    %c0_28 = arith.constant 0 : index
    %c0_29 = arith.constant 0 : index
    %44 = vector.load %arg2[%c0_28, %c0_29] : memref<72x1xf32, #tpu.memory_space<vmem>>, vector<72x1xf32>
    %45 = arith.mulf %44, %43 : vector<72x1xf32>
    %c0_30 = arith.constant 0 : index
    %c0_31 = arith.constant 0 : index
    %46 = vector.load %arg3[%c0_30, %c0_31] : memref<72x1xf32, #tpu.memory_space<vmem>>, vector<72x1xf32>
    %47 = arith.mulf %21, %45 : vector<72x1xf32>
    %48 = arith.subf %46, %47 : vector<72x1xf32>
    %c0_32 = arith.constant 0 : index
    %c0_33 = arith.constant 0 : index
    %c0_34 = arith.constant 0 : index
    %49 = vector.load %arg4[%c0_32, %c0_33, %c0_34] : memref<2x72x784xf32, #tpu.memory_space<vmem>>, vector<1x72x784xf32>
    %50 = vector.shape_cast %49 : vector<1x72x784xf32> to vector<72x784xf32>
    %51 = vector.broadcast %45 : vector<72x1xf32> to vector<72x784xf32>
    %52 = arith.mulf %50, %51 : vector<72x784xf32>
    %53 = vector.broadcast %48 : vector<72x1xf32> to vector<72x784xf32>
    %54 = arith.addf %52, %53 : vector<72x784xf32>
    %c0_35 = arith.constant 0 : index
    %c0_36 = arith.constant 0 : index
    %c0_37 = arith.constant 0 : index
    %55 = vector.load %arg4[%c0_35, %c0_36, %c0_37] : memref<2x72x784xf32, #tpu.memory_space<vmem>>, vector<1x72x784xf32>
    %56 = vector.shape_cast %55 : vector<1x72x784xf32> to vector<72x784xf32>
    %57 = vector.shape_cast %54 : vector<72x784xf32> to vector<1x72x784xf32>
    tpu.vector_store %arg4[%c0_35, %c0_36, %c0_37], %57 {strides = array<i32>} : memref<2x72x784xf32, #tpu.memory_space<vmem>>, vector<1x72x784xf32>,
    %c1_38 = arith.constant 1 : index
    %c0_39 = arith.constant 0 : index
    %c0_40 = arith.constant 0 : index
    %58 = vector.load %arg4[%c1_38, %c0_39, %c0_40] : memref<2x72x784xf32, #tpu.memory_space<vmem>>, vector<1x72x784xf32>
    %59 = vector.shape_cast %58 : vector<1x72x784xf32> to vector<72x784xf32>
    %60 = vector.broadcast %45 : vector<72x1xf32> to vector<72x784xf32>
    %61 = arith.mulf %59, %60 : vector<72x784xf32>
    %62 = vector.broadcast %48 : vector<72x1xf32> to vector<72x784xf32>
    %63 = arith.addf %61, %62 : vector<72x784xf32>
    %c1_41 = arith.constant 1 : index
    %c0_42 = arith.constant 0 : index
    %c0_43 = arith.constant 0 : index
    %64 = vector.load %arg4[%c1_41, %c0_42, %c0_43] : memref<2x72x784xf32, #tpu.memory_space<vmem>>, vector<1x72x784xf32>
    %65 = vector.shape_cast %64 : vector<1x72x784xf32> to vector<72x784xf32>
    %66 = vector.shape_cast %63 : vector<72x784xf32> to vector<1x72x784xf32>
    tpu.vector_store %arg4[%c1_41, %c0_42, %c0_43], %66 {strides = array<i32>} : memref<2x72x784xf32, #tpu.memory_space<vmem>>, vector<1x72x784xf32>,
    return
  }
}

</mosaic_0001>

<llo_original>
// kernel: tpu_custom_call.1
$region0: #{tpu_custom_call.1}
  #allocation0 [shape = 'u32[]', space=smem, size = 0x4, offset = 0x4, fixed_abs, tag = 'smem constant byte address 0x4 - core index']
  #allocation1 [shape = 'u32[144,128]{1,0:T(1,128)}', space=vmem, size = 0x12000, scoped, tag = 'internal scratch']
  %s0 = inlined_call_operand.hbm [shape: f32[2,24,784], index: 0, kind: input, shape index: {}]
  %s1 = inlined_call_operand.vmem [shape: f32[72,24], index: 1, kind: input, shape index: {}]
  %s2 = inlined_call_operand.vmem [shape: f32[72,1], index: 2, kind: input, shape index: {}]
  %s3 = inlined_call_operand.vmem [shape: f32[72,1], index: 3, kind: input, shape index: {}]
  %s4 = inlined_call_operand.hbm [shape: f32[2,72,784], index: 4, kind: output, shape index: {}]
  %s5 = sld [smem:[#allocation0]]
  $region30: #{tpu_custom_call.1} parent=0
    _
  %s7 = ssub.s32 1, %s5
  %s8 = scalar_select 0, %s7, %s5
  $region1: #{tpu_custom_call.1} parent=0
    #allocation2 [shape = 'u8[172032]{0}', space=vmem, size = 0x2a000, scoped, tag = 'input window, operand 0, single buffered']
    #allocation3 [shape = 's32[1]{0}', space=sflag, size = 0x4, scoped, tag = 'scoped memory for tpu_custom_call.1']
    #allocation4 [shape = 's32[1]{0}', space=sflag, size = 0x4, scoped, tag = 'scoped memory for tpu_custom_call.1']
    #allocation5 [shape = 'u8[516096]{0}', space=vmem, size = 0x7e000, scoped, tag = 'output window, operand 0, single buffered']
    %9 = vsyncpa [#allocation3], 0
    %10 = vsyncpa [#allocation4], 0
    // Predicated region
    $region2: #{tpu_custom_call.1} parent=1 // pred_check
      _
    $region3: #{tpu_custom_call.1} parent=1 // pred_check_branch
      %12 = sbr.rel (0) target = $region5
    $region4: #{tpu_custom_call.1} parent=1 // pred_region
      %s14 = ssub.s32 5376, 5376
      %15 = vsyncadd [#allocation3], %s14
      %s16 = sshll.u32 [#allocation2], 4
      %s17 = int_to_ptr.vmem [resolvable:$true] %s16
      %22 = dma.hbm_to_vmem [thread:$0]  %s0, 5376, %s17, [#allocation3], 896, 896, 56
    $region5: #{tpu_custom_call.1} parent=1 // pred_fallthru
      _
    // Predicated region
    $region6: #{tpu_custom_call.1} parent=1 // pred_check
      _
    $region7: #{tpu_custom_call.1} parent=1 // pred_check_branch
      %24 = sbr.rel (0) target = $region9
    $region8: #{tpu_custom_call.1} parent=1 // pred_region
      _
    $region9: #{tpu_custom_call.1} parent=1 // pred_fallthru
      _
    // Predicated region
    $region10: #{tpu_custom_call.1} parent=1 // pred_check
      _
    $region11: #{tpu_custom_call.1} parent=1 // pred_check_branch
      %26 = sbr.rel (0) target = $region13
    $region12: #{tpu_custom_call.1} parent=1 // pred_region
      _
    $region13: #{tpu_custom_call.1} parent=1 // pred_fallthru
      _
    // Predicated region
    $region14: #{tpu_custom_call.1} parent=1 // pred_check
      _
    $region15: #{tpu_custom_call.1} parent=1 // pred_check_branch
      %28 = sbr.rel (0) target = $region17
    $region16: #{tpu_custom_call.1} parent=1 // pred_region
      _
    $region17: #{tpu_custom_call.1} parent=1 // pred_fallthru
      _
    // Predicated region
    $region18: #{tpu_custom_call.1} parent=1 // pred_check
      _
    $region19: #{tpu_custom_call.1} parent=1 // pred_check_branch
      %30 = sbr.rel (0) target = $region21
    $region20: #{tpu_custom_call.1} parent=1 // pred_region
      %31 = dma.done [#allocation3], 5376
    $region21: #{tpu_custom_call.1} parent=1 // pred_fallthru
      _
    %v32 = vld [vmem:[%s1] sm:$0xff]
    %v33 = vld [vmem:[%s1 + $0x8] sm:$0xff]
    %v34 = vld [vmem:[%s1 + $0x10] sm:$0xff]
    %v35 = vld [vmem:[%s1 + $0x18] sm:$0xff]
    %v36 = vld [vmem:[%s1 + $0x20] sm:$0xff]
    %v37 = vld [vmem:[%s1 + $0x28] sm:$0xff]
    %v38 = vld [vmem:[%s1 + $0x30] sm:$0xff]
    %v39 = vld [vmem:[%s1 + $0x38] sm:$0xff]
    %v40 = vld [vmem:[%s1 + $0x40] sm:$0xff]
    %v41 = vld [vmem:[#allocation2] sm:$0xff]
    %v42 = vld [vmem:[#allocation2 + $0x8] sm:$0xff]
    %v43 = vld [vmem:[#allocation2 + $0x10] sm:$0xff]
    %v44 = vld [vmem:[#allocation2 + $0x18] sm:$0xff]
    %v45 = vld [vmem:[#allocation2 + $0x20] sm:$0xff]
    %v46 = vld [vmem:[#allocation2 + $0x28] sm:$0xff]
    %v47 = vld [vmem:[#allocation2 + $0x30] sm:$0xff]
    %v48 = vld [vmem:[#allocation2 + $0x38] sm:$0xff]
    %v49 = vld [vmem:[#allocation2 + $0x40] sm:$0xff]
    %v50 = vld [vmem:[#allocation2 + $0x48] sm:$0xff]
    %v51 = vld [vmem:[#allocation2 + $0x50] sm:$0xff]
    %v52 = vld [vmem:[#allocation2 + $0x58] sm:$0xff]
    %v53 = vld [vmem:[#allocation2 + $0x60] sm:$0xff]
    %v54 = vld [vmem:[#allocation2 + $0x68] sm:$0xff]
    %v55 = vld [vmem:[#allocation2 + $0x70] sm:$0xff]
    %v56 = vld [vmem:[#allocation2 + $0x78] sm:$0xff]
    %v57 = vld [vmem:[#allocation2 + $0x80] sm:$0xff]
    %v58 = vld [vmem:[#allocation2 + $0x88] sm:$0xff]
    %v59 = vld [vmem:[#allocation2 + $0x90] sm:$0xff]
    %v60 = vld [vmem:[#allocation2 + $0x98] sm:$0xff]
    %v61 = vld [vmem:[#allocation2 + $0xa0] sm:$0xff]
    %vm62 = vcmask 195584
    %v64 = vsel %vm62, %v32, 0
    %v67 = vsel %vm62, %v33, 0
    %v70 = vsel %vm62, %v34, 0
    %v73 = vsel %vm62, %v35, 0
    %v76 = vsel %vm62, %v36, 0
    %v79 = vsel %vm62, %v37, 0
    %v82 = vsel %vm62, %v38, 0
    %v85 = vsel %vm62, %v39, 0
    %v88 = vsel %vm62, %v40, 0
    %90 = vmatprep.subr.mxu0 %v42
    %91 = vmatpush1.msra.mxu0 %v41
    %92 = vmatprep.subr.mxu0 %v49
    %93 = vmatpush1.msra.mxu0 %v48
    %94 = vmatprep.subr.mxu0 %v56
    %95 = vmatpush1.msra.mxu0 %v55
    %96 = vmatprep.subr.mxu0 0.0
    %97 = vmatpush1.msra.mxu0 0.0
    %98 = vmatprep.subr.mxu0 0.0
    %99 = vmatpush1.msra.mxu0 0.0
    %100 = vmatprep.subr.mxu0 0.0
    %101 = vmatpush1.msra.mxu0 0.0
    %102 = vmatprep.subr.mxu0 0.0
    %103 = vmatpush1.msra.mxu0 0.0
    %104 = vmatprep.subr.mxu0 0.0
    %105 = vmatpush1.msra.mxu0 0.0
    %106 = vmatprep.subr.mxu0 0.0
    %107 = vmatpush1.msra.mxu0 0.0
    %108 = vmatprep.subr.mxu0 0.0
    %109 = vmatpush1.msra.mxu0 0.0
    %110 = vmatprep.subr.mxu0 0.0
    %111 = vmatpush1.msra.mxu0 0.0
    %112 = vmatprep.subr.mxu0 0.0
    %113 = vmatpush1.msra.mxu0 0.0
    %114 = vmatprep.subr.mxu0 0.0
    %115 = vmatpush1.msra.mxu0 0.0
    %116 = vmatprep.subr.mxu0 0.0
    %117 = vmatpush1.msra.mxu0 0.0
    %118 = vmatprep.subr.mxu0 0.0
    %119 = vmatpush1.msra.mxu0 0.0
    %120 = vmatprep.subr.mxu0 0.0
    %121 = vmatpush1.msra.mxu0 0.0
    %122 = vmatprep.subr.mxu0 0.0
    %123 = vmatpush1.msra.mxu0 0.0
    %124 = vmatprep.subr.mxu0 0.0
    %125 = vmatpush1.msra.mxu0 0.0
    %126 = vmatprep.subr.mxu0 0.0
    %127 = vmatpush1.msra.mxu0 0.0
    %128 = vmatprep.subr.mxu0 0.0
    %129 = vmatpush1.msra.mxu0 0.0
    %130 = vmatprep.subr.mxu0 0.0
    %131 = vmatpush1.msra.mxu0 0.0
    %132 = vmatprep.subr.mxu0 0.0
    %133 = vmatpush1.msra.mxu0 0.0
    %134 = vmatprep.subr.mxu0 0.0
    %135 = vmatpush1.msra.mxu0 0.0
    %136 = vmatprep.subr.mxu0 0.0
    %137 = vmatpush1.msra.mxu0 0.0
    %138 = vmatprep.subr.mxu0 0.0
    %139 = vmatpush1.msra.mxu0 0.0
    %140 = vmatprep.subr.mxu0 0.0
    %141 = vmatpush1.msra.mxu0 0.0
    %142 = vmatprep.subr.mxu0 0.0
    %143 = vmatpush1.msra.mxu0 0.0
    %144 = vmatprep.subr.mxu0 0.0
    %145 = vmatpush1.msra.mxu0 0.0
    %146 = vmatprep.subr.mxu0 0.0
    %147 = vmatpush1.msra.mxu0 0.0
    %148 = vmatprep.subr.mxu0 0.0
    %149 = vmatpush1.msra.mxu0 0.0
    %150 = vmatprep.subr.mxu0 0.0
    %151 = vmatpush1.msra.mxu0 0.0
    %152 = vmatprep.subr.mxu0 0.0
    %153 = vmatpush1.msra.mxu0 0.0
    %154 = vmatprep.mubr.f32.mxu0 0.0
    %155 = vmatmul.mubr.f32.gmra.mrb[0].mxu0 %v64
    %v156 = vpop.f32.mrb[0].mxu0
    %v157 = vadd.f32 0.0, %v156
    %v158 = vpop.f32.mrb[0].mxu0
    %v159 = vadd.f32 0.0, %v158
    %160 = vmatprep.mubr.f32.mxu0 0.0
    %161 = vmatmul.mubr.f32.gmra.mrb[0].mxu0 %v67
    %v162 = vpop.f32.mrb[0].mxu0
    %v163 = vadd.f32 0.0, %v162
    %v164 = vpop.f32.mrb[0].mxu0
    %v165 = vadd.f32 0.0, %v164
    %166 = vmatprep.mubr.f32.mxu0 0.0
    %167 = vmatmul.mubr.f32.gmra.mrb[0].mxu0 %v70
    %v168 = vpop.f32.mrb[0].mxu0
    %v169 = vadd.f32 0.0, %v168
    %v170 = vpop.f32.mrb[0].mxu0
    %v171 = vadd.f32 0.0, %v170
    %172 = vmatprep.mubr.f32.mxu0 0.0
    %173 = vmatmul.mubr.f32.gmra.mrb[0].mxu0 %v73
    %v174 = vpop.f32.mrb[0].mxu0
    %v175 = vadd.f32 0.0, %v174
    %v176 = vpop.f32.mrb[0].mxu0
    %v177 = vadd.f32 0.0, %v176
    %178 = vmatprep.mubr.f32.mxu0 0.0
    %179 = vmatmul.mubr.f32.gmra.mrb[0].mxu0 %v76
    %v180 = vpop.f32.mrb[0].mxu0
    %v181 = vadd.f32 0.0, %v180
    %v182 = vpop.f32.mrb[0].mxu0
    %v183 = vadd.f32 0.0, %v182
    %184 = vmatprep.mubr.f32.mxu0 0.0
    %185 = vmatmul.mubr.f32.gmra.mrb[0].mxu0 %v79
    %v186 = vpop.f32.mrb[0].mxu0
    %v187 = vadd.f32 0.0, %v186
    %v188 = vpop.f32.mrb[0].mxu0
    %v189 = vadd.f32 0.0, %v188
    %190 = vmatprep.mubr.f32.mxu0 0.0
    %191 = vmatmul.mubr.f32.gmra.mrb[0].mxu0 %v82
    %v192 = vpop.f32.mrb[0].mxu0
    %v193 = vadd.f32 0.0, %v192
    %v194 = vpop.f32.mrb[0].mxu0
    %v195 = vadd.f32 0.0, %v194
    %196 = vmatprep.mubr.f32.mxu0 0.0
    %197 = vmatmul.mubr.f32.gmra.mrb[0].mxu0 %v85
    %v198 = vpop.f32.mrb[0].mxu0
    %v199 = vadd.f32 0.0, %v198
    %v200 = vpop.f32.mrb[0].mxu0
    %v201 = vadd.f32 0.0, %v200
    %202 = vmatprep.mubr.f32.mxu0 0.0
    %203 = vmatmul.mubr.f32.gmra.mrb[0].mxu0 %v88
    %v204 = vpop.f32.mrb[0].mxu0
    %v205 = vadd.f32 0.0, %v204
    %v206 = vpop.f32.mrb[0].mxu0
    %v207 = vadd.f32 0.0, %v206
    %208 = vdwg.mxu0
    %209 = vmatprep.subr.mxu0 %v44
    %210 = vmatpush1.msra.mxu0 %v43
    %211 = vmatprep.subr.mxu0 %v51
    %212 = vmatpush1.msra.mxu0 %v50
    %213 = vmatprep.subr.mxu0 %v58
    %214 = vmatpush1.msra.mxu0 %v57
    %215 = vmatprep.subr.mxu0 0.0
    %216 = vmatpush1.msra.mxu0 0.0
    %217 = vmatprep.subr.mxu0 0.0
    %218 = vmatpush1.msra.mxu0 0.0
    %219 = vmatprep.subr.mxu0 0.0
    %220 = vmatpush1.msra.mxu0 0.0
    %221 = vmatprep.subr.mxu0 0.0
    %222 = vmatpush1.msra.mxu0 0.0
    %223 = vmatprep.subr.mxu0 0.0
    %224 = vmatpush1.msra.mxu0 0.0
    %225 = vmatprep.subr.mxu0 0.0
    %226 = vmatpush1.msra.mxu0 0.0
    %227 = vmatprep.subr.mxu0 0.0
    %228 = vmatpush1.msra.mxu0 0.0
    %229 = vmatprep.subr.mxu0 0.0
    %230 = vmatpush1.msra.mxu0 0.0
    %231 = vmatprep.subr.mxu0 0.0
    %232 = vmatpush1.msra.mxu0 0.0
    %233 = vmatprep.subr.mxu0 0.0
    %234 = vmatpush1.msra.mxu0 0.0
    %235 = vmatprep.subr.mxu0 0.0
    %236 = vmatpush1.msra.mxu0 0.0
    %237 = vmatprep.subr.mxu0 0.0
    %238 = vmatpush1.msra.mxu0 0.0
    %239 = vmatprep.subr.mxu0 0.0
    %240 = vmatpush1.msra.mxu0 0.0
    %241 = vmatprep.subr.mxu0 0.0
    %242 = vmatpush1.msra.mxu0 0.0
    %243 = vmatprep.subr.mxu0 0.0
    %244 = vmatpush1.msra.mxu0 0.0
    %245 = vmatprep.subr.mxu0 0.0
    %246 = vmatpush1.msra.mxu0 0.0
    %247 = vmatprep.subr.mxu0 0.0
    %248 = vmatpush1.msra.mxu0 0.0
    %249 = vmatprep.subr.mxu0 0.0
    %250 = vmatpush1.msra.mxu0 0.0
    %251 = vmatprep.subr.mxu0 0.0
    %252 = vmatpush1.msra.mxu0 0.0
    %253 = vmatprep.subr.mxu0 0.0
    %254 = vmatpush1.msra.mxu0 0.0
    %255 = vmatprep.subr.mxu0 0.0
    %256 = vmatpush1.msra.mxu0 0.0
    %257 = vmatprep.subr.mxu0 0.0
    %258 = vmatpush1.msra.mxu0 0.0
    %259 = vmatprep.subr.mxu0 0.0
    %260 = vmatpush1.msra.mxu0 0.0
    %261 = vmatprep.subr.mxu0 0.0
    %262 = vmatpush1.msra.mxu0 0.0
    %263 = vmatprep.subr.mxu0 0.0
    %264 = vmatpush1.msra.mxu0 0.0
    %265 = vmatprep.subr.mxu0 0.0
    %266 = vmatpush1.msra.mxu0 0.0
    %267 = vmatprep.subr.mxu0 0.0
    %268 = vmatpush1.msra.mxu0 0.0
    %269 = vmatprep.subr.mxu0 0.0
    %270 = vmatpush1.msra.mxu0 0.0
    %271 = vmatprep.subr.mxu0 0.0
    %272 = vmatpush1.msra.mxu0 0.0
    %273 = vmatprep.mubr.f32.mxu0 0.0
    %274 = vmatmul.mubr.f32.gmra.mrb[0].mxu0 %v64
    %v275 = vpop.f32.mrb[0].mxu0
    %v276 = vadd.f32 0.0, %v275
    %v277 = vpop.f32.mrb[0].mxu0
    %v278 = vadd.f32 0.0, %v277
    %279 = vmatprep.mubr.f32.mxu0 0.0
    %280 = vmatmul.mubr.f32.gmra.mrb[0].mxu0 %v67
    %v281 = vpop.f32.mrb[0].mxu0
    %v282 = vadd.f32 0.0, %v281
    %v283 = vpop.f32.mrb[0].mxu0
    %v284 = vadd.f32 0.0, %v283
    %285 = vmatprep.mubr.f32.mxu0 0.0
    %286 = vmatmul.mubr.f32.gmra.mrb[0].mxu0 %v70
    %v287 = vpop.f32.mrb[0].mxu0
    %v288 = vadd.f32 0.0, %v287
    %v289 = vpop.f32.mrb[0].mxu0
    %v290 = vadd.f32 0.0, %v289
    %291 = vmatprep.mubr.f32.mxu0 0.0
    %292 = vmatmul.mubr.f32.gmra.mrb[0].mxu0 %v73
    %v293 = vpop.f32.mrb[0].mxu0
    %v294 = vadd.f32 0.0, %v293
    %v295 = vpop.f32.mrb[0].mxu0
    %v296 = vadd.f32 0.0, %v295
    %297 = vmatprep.mubr.f32.mxu0 0.0
    %298 = vmatmul.mubr.f32.gmra.mrb[0].mxu0 %v76
    %v299 = vpop.f32.mrb[0].mxu0
    %v300 = vadd.f32 0.0, %v299
    %v301 = vpop.f32.mrb[0].mxu0
    %v302 = vadd.f32 0.0, %v301
    %303 = vmatprep.mubr.f32.mxu0 0.0
    %304 = vmatmul.mubr.f32.gmra.mrb[0].mxu0 %v79
    %v305 = vpop.f32.mrb[0].mxu0
    %v306 = vadd.f32 0.0, %v305
    %v307 = vpop.f32.mrb[0].mxu0
    %v308 = vadd.f32 0.0, %v307
    %309 = vmatprep.mubr.f32.mxu0 0.0
    %310 = vmatmul.mubr.f32.gmra.mrb[0].mxu0 %v82
    %v311 = vpop.f32.mrb[0].mxu0
    %v312 = vadd.f32 0.0, %v311
    %v313 = vpop.f32.mrb[0].mxu0
    %v314 = vadd.f32 0.0, %v313
    %315 = vmatprep.mubr.f32.mxu0 0.0
    %316 = vmatmul.mubr.f32.gmra.mrb[0].mxu0 %v85
    %v317 = vpop.f32.mrb[0].mxu0
    %v318 = vadd.f32 0.0, %v317
    %v319 = vpop.f32.mrb[0].mxu0
    %v320 = vadd.f32 0.0, %v319
    %321 = vmatprep.mubr.f32.mxu0 0.0
    %322 = vmatmul.mubr.f32.gmra.mrb[0].mxu0 %v88
    %v323 = vpop.f32.mrb[0].mxu0
    %v324 = vadd.f32 0.0, %v323
    %v325 = vpop.f32.mrb[0].mxu0
    %v326 = vadd.f32 0.0, %v325
    %327 = vdwg.mxu0
    %328 = vmatprep.subr.mxu0 %v46
    %329 = vmatpush1.msra.mxu0 %v45
    %330 = vmatprep.subr.mxu0 %v53
    %331 = vmatpush1.msra.mxu0 %v52
    %332 = vmatprep.subr.mxu0 %v60
    %333 = vmatpush1.msra.mxu0 %v59
    %334 = vmatprep.subr.mxu0 0.0
    %335 = vmatpush1.msra.mxu0 0.0
    %336 = vmatprep.subr.mxu0 0.0
    %337 = vmatpush1.msra.mxu0 0.0
    %338 = vmatprep.subr.mxu0 0.0
    %339 = vmatpush1.msra.mxu0 0.0
    %340 = vmatprep.subr.mxu0 0.0
    %341 = vmatpush1.msra.mxu0 0.0
    %342 = vmatprep.subr.mxu0 0.0
    %343 = vmatpush1.msra.mxu0 0.0
    %344 = vmatprep.subr.mxu0 0.0
    %345 = vmatpush1.msra.mxu0 0.0
    %346 = vmatprep.subr.mxu0 0.0
    %347 = vmatpush1.msra.mxu0 0.0
    %348 = vmatprep.subr.mxu0 0.0
    %349 = vmatpush1.msra.mxu0 0.0
    %350 = vmatprep.subr.mxu0 0.0
    %351 = vmatpush1.msra.mxu0 0.0
    %352 = vmatprep.subr.mxu0 0.0
    %353 = vmatpush1.msra.mxu0 0.0
    %354 = vmatprep.subr.mxu0 0.0
    %355 = vmatpush1.msra.mxu0 0.0
    %356 = vmatprep.subr.mxu0 0.0
    %357 = vmatpush1.msra.mxu0 0.0
    %358 = vmatprep.subr.mxu0 0.0
    %359 = vmatpush1.msra.mxu0 0.0
    %360 = vmatprep.subr.mxu0 0.0
    %361 = vmatpush1.msra.mxu0 0.0
    %362 = vmatprep.subr.mxu0 0.0
    %363 = vmatpush1.msra.mxu0 0.0
    %364 = vmatprep.subr.mxu0 0.0
    %365 = vmatpush1.msra.mxu0 0.0
    %366 = vmatprep.subr.mxu0 0.0
    %367 = vmatpush1.msra.mxu0 0.0
    %368 = vmatprep.subr.mxu0 0.0
    %369 = vmatpush1.msra.mxu0 0.0
    %370 = vmatprep.subr.mxu0 0.0
    %371 = vmatpush1.msra.mxu0 0.0
    %372 = vmatprep.subr.mxu0 0.0
    %373 = vmatpush1.msra.mxu0 0.0
    %374 = vmatprep.subr.mxu0 0.0
    %375 = vmatpush1.msra.mxu0 0.0
    %376 = vmatprep.subr.mxu0 0.0
    %377 = vmatpush1.msra.mxu0 0.0
    %378 = vmatprep.subr.mxu0 0.0
    %379 = vmatpush1.msra.mxu0 0.0
    %380 = vmatprep.subr.mxu0 0.0
    %381 = vmatpush1.msra.mxu0 0.0
    %382 = vmatprep.subr.mxu0 0.0
    %383 = vmatpush1.msra.mxu0 0.0
    %384 = vmatprep.subr.mxu0 0.0
    %385 = vmatpush1.msra.mxu0 0.0
    %386 = vmatprep.subr.mxu0 0.0
    %387 = vmatpush1.msra.mxu0 0.0
    %388 = vmatprep.subr.mxu0 0.0
    %389 = vmatpush1.msra.mxu0 0.0
    %390 = vmatprep.subr.mxu0 0.0
    %391 = vmatpush1.msra.mxu0 0.0
    %392 = vmatprep.mubr.f32.mxu0 0.0
    %393 = vmatmul.mubr.f32.gmra.mrb[0].mxu0 %v64
    %v394 = vpop.f32.mrb[0].mxu0
    %v395 = vadd.f32 0.0, %v394
    %v396 = vpop.f32.mrb[0].mxu0
    %v397 = vadd.f32 0.0, %v396
    %398 = vmatprep.mubr.f32.mxu0 0.0
    %399 = vmatmul.mubr.f32.gmra.mrb[0].mxu0 %v67
    %v400 = vpop.f32.mrb[0].mxu0
    %v401 = vadd.f32 0.0, %v400
    %v402 = vpop.f32.mrb[0].mxu0
    %v403 = vadd.f32 0.0, %v402
    %404 = vmatprep.mubr.f32.mxu0 0.0
    %405 = vmatmul.mubr.f32.gmra.mrb[0].mxu0 %v70
    %v406 = vpop.f32.mrb[0].mxu0
    %v407 = vadd.f32 0.0, %v406
    %v408 = vpop.f32.mrb[0].mxu0
    %v409 = vadd.f32 0.0, %v408
    %410 = vmatprep.mubr.f32.mxu0 0.0
    %411 = vmatmul.mubr.f32.gmra.mrb[0].mxu0 %v73
    %v412 = vpop.f32.mrb[0].mxu0
    %v413 = vadd.f32 0.0, %v412
    %v414 = vpop.f32.mrb[0].mxu0
    %v415 = vadd.f32 0.0, %v414
    %416 = vmatprep.mubr.f32.mxu0 0.0
    %417 = vmatmul.mubr.f32.gmra.mrb[0].mxu0 %v76
    %v418 = vpop.f32.mrb[0].mxu0
    %v419 = vadd.f32 0.0, %v418
    %v420 = vpop.f32.mrb[0].mxu0
    %v421 = vadd.f32 0.0, %v420
    %422 = vmatprep.mubr.f32.mxu0 0.0
    %423 = vmatmul.mubr.f32.gmra.mrb[0].mxu0 %v79
    %v424 = vpop.f32.mrb[0].mxu0
    %v425 = vadd.f32 0.0, %v424
    %v426 = vpop.f32.mrb[0].mxu0
    %v427 = vadd.f32 0.0, %v426
    %428 = vmatprep.mubr.f32.mxu0 0.0
    %429 = vmatmul.mubr.f32.gmra.mrb[0].mxu0 %v82
    %v430 = vpop.f32.mrb[0].mxu0
    %v431 = vadd.f32 0.0, %v430
    %v432 = vpop.f32.mrb[0].mxu0
    %v433 = vadd.f32 0.0, %v432
    %434 = vmatprep.mubr.f32.mxu0 0.0
    %435 = vmatmul.mubr.f32.gmra.mrb[0].mxu0 %v85
    %v436 = vpop.f32.mrb[0].mxu0
    %v437 = vadd.f32 0.0, %v436
    %v438 = vpop.f32.mrb[0].mxu0
    %v439 = vadd.f32 0.0, %v438
    %440 = vmatprep.mubr.f32.mxu0 0.0
    %441 = vmatmul.mubr.f32.gmra.mrb[0].mxu0 %v88
    %v442 = vpop.f32.mrb[0].mxu0
    %v443 = vadd.f32 0.0, %v442
    %v444 = vpop.f32.mrb[0].mxu0
    %v445 = vadd.f32 0.0, %v444
    %446 = vdwg.mxu0
    %447 = vmatprep.subr.mxu0 0.0
    %448 = vmatpush1.msra.mxu0 %v47
    %449 = vmatprep.subr.mxu0 0.0
    %450 = vmatpush1.msra.mxu0 %v54
    %451 = vmatprep.subr.mxu0 0.0
    %452 = vmatpush1.msra.mxu0 %v61
    %453 = vmatprep.subr.mxu0 0.0
    %454 = vmatpush1.msra.mxu0 0.0
    %455 = vmatprep.subr.mxu0 0.0
    %456 = vmatpush1.msra.mxu0 0.0
    %457 = vmatprep.subr.mxu0 0.0
    %458 = vmatpush1.msra.mxu0 0.0
    %459 = vmatprep.subr.mxu0 0.0
    %460 = vmatpush1.msra.mxu0 0.0
    %461 = vmatprep.subr.mxu0 0.0
    %462 = vmatpush1.msra.mxu0 0.0
    %463 = vmatprep.subr.mxu0 0.0
    %464 = vmatpush1.msra.mxu0 0.0
    %465 = vmatprep.subr.mxu0 0.0
    %466 = vmatpush1.msra.mxu0 0.0
    %467 = vmatprep.subr.mxu0 0.0
    %468 = vmatpush1.msra.mxu0 0.0
    %469 = vmatprep.subr.mxu0 0.0
    %470 = vmatpush1.msra.mxu0 0.0
    %471 = vmatprep.subr.mxu0 0.0
    %472 = vmatpush1.msra.mxu0 0.0
    %473 = vmatprep.subr.mxu0 0.0
    %474 = vmatpush1.msra.mxu0 0.0
    %475 = vmatprep.subr.mxu0 0.0
    %476 = vmatpush1.msra.mxu0 0.0
    %477 = vmatprep.subr.mxu0 0.0
    %478 = vmatpush1.msra.mxu0 0.0
    %479 = vmatprep.subr.mxu0 0.0
    %480 = vmatpush1.msra.mxu0 0.0
    %481 = vmatprep.subr.mxu0 0.0
    %482 = vmatpush1.msra.mxu0 0.0
    %483 = vmatprep.subr.mxu0 0.0
    %484 = vmatpush1.msra.mxu0 0.0
    %485 = vmatprep.subr.mxu0 0.0
    %486 = vmatpush1.msra.mxu0 0.0
    %487 = vmatprep.subr.mxu0 0.0
    %488 = vmatpush1.msra.mxu0 0.0
    %489 = vmatprep.subr.mxu0 0.0
    %490 = vmatpush1.msra.mxu0 0.0
    %491 = vmatprep.subr.mxu0 0.0
    %492 = vmatpush1.msra.mxu0 0.0
    %493 = vmatprep.subr.mxu0 0.0
    %494 = vmatpush1.msra.mxu0 0.0
    %495 = vmatprep.subr.mxu0 0.0
    %496 = vmatpush1.msra.mxu0 0.0
    %497 = vmatprep.subr.mxu0 0.0
    %498 = vmatpush1.msra.mxu0 0.0
    %499 = vmatprep.subr.mxu0 0.0
    %500 = vmatpush1.msra.mxu0 0.0
    %501 = vmatprep.subr.mxu0 0.0
    %502 = vmatpush1.msra.mxu0 0.0
    %503 = vmatprep.subr.mxu0 0.0
    %504 = vmatpush1.msra.mxu0 0.0
    %505 = vmatprep.subr.mxu0 0.0
    %506 = vmatpush1.msra.mxu0 0.0
    %507 = vmatprep.subr.mxu0 0.0
    %508 = vmatpush1.msra.mxu0 0.0
    %509 = vmatprep.subr.mxu0 0.0
    %510 = vmatpush1.msra.mxu0 0.0
    %511 = vmatprep.mubr.f32.mxu0 0.0
    %512 = vmatmul.mubr.f32.gmra.mrb[0].mxu0 %v64
    %v513 = vpop.f32.mrb[0].mxu0
    %v514 = vadd.f32 0.0, %v513
    %v515 = vpop.f32.mrb[0].mxu0
    %516 = vmatprep.mubr.f32.mxu0 0.0
    %517 = vmatmul.mubr.f32.gmra.mrb[0].mxu0 %v67
    %v518 = vpop.f32.mrb[0].mxu0
    %v519 = vadd.f32 0.0, %v518
    %v520 = vpop.f32.mrb[0].mxu0
    %521 = vmatprep.mubr.f32.mxu0 0.0
    %522 = vmatmul.mubr.f32.gmra.mrb[0].mxu0 %v70
    %v523 = vpop.f32.mrb[0].mxu0
    %v524 = vadd.f32 0.0, %v523
    %v525 = vpop.f32.mrb[0].mxu0
    %526 = vmatprep.mubr.f32.mxu0 0.0
    %527 = vmatmul.mubr.f32.gmra.mrb[0].mxu0 %v73
    %v528 = vpop.f32.mrb[0].mxu0
    %v529 = vadd.f32 0.0, %v528
    %v530 = vpop.f32.mrb[0].mxu0
    %531 = vmatprep.mubr.f32.mxu0 0.0
    %532 = vmatmul.mubr.f32.gmra.mrb[0].mxu0 %v76
    %v533 = vpop.f32.mrb[0].mxu0
    %v534 = vadd.f32 0.0, %v533
    %v535 = vpop.f32.mrb[0].mxu0
    %536 = vmatprep.mubr.f32.mxu0 0.0
    %537 = vmatmul.mubr.f32.gmra.mrb[0].mxu0 %v79
    %v538 = vpop.f32.mrb[0].mxu0
    %v539 = vadd.f32 0.0, %v538
    %v540 = vpop.f32.mrb[0].mxu0
    %541 = vmatprep.mubr.f32.mxu0 0.0
    %542 = vmatmul.mubr.f32.gmra.mrb[0].mxu0 %v82
    %v543 = vpop.f32.mrb[0].mxu0
    %v544 = vadd.f32 0.0, %v543
    %v545 = vpop.f32.mrb[0].mxu0
    %546 = vmatprep.mubr.f32.mxu0 0.0
    %547 = vmatmul.mubr.f32.gmra.mrb[0].mxu0 %v85
    %v548 = vpop.f32.mrb[0].mxu0
    %v549 = vadd.f32 0.0, %v548
    %v550 = vpop.f32.mrb[0].mxu0
    %551 = vmatprep.mubr.f32.mxu0 0.0
    %552 = vmatmul.mubr.f32.gmra.mrb[0].mxu0 %v88
    %v553 = vpop.f32.mrb[0].mxu0
    %v554 = vadd.f32 0.0, %v553
    %v555 = vpop.f32.mrb[0].mxu0
    %556 = vdwg.mxu0
    %557 = vst [vmem:[#allocation5] sm:$0xff] %v157
    %558 = vst [vmem:[#allocation5 + $0x8] sm:$0xff] %v159
    %559 = vst [vmem:[#allocation5 + $0x10] sm:$0xff] %v276
    %560 = vst [vmem:[#allocation5 + $0x18] sm:$0xff] %v278
    %561 = vst [vmem:[#allocation5 + $0x20] sm:$0xff] %v395
    %562 = vst [vmem:[#allocation5 + $0x28] sm:$0xff] %v397
    %vm563 = vcmask 130048
    %564 = vst.msk [vmem:[#allocation5 + $0x30] sm:$0xff] %vm563, %v514
    %565 = vst [vmem:[#allocation5 + $0x38] sm:$0xff] %v163
    %566 = vst [vmem:[#allocation5 + $0x40] sm:$0xff] %v165
    %567 = vst [vmem:[#allocation5 + $0x48] sm:$0xff] %v282
    %568 = vst [vmem:[#allocation5 + $0x50] sm:$0xff] %v284
    %569 = vst [vmem:[#allocation5 + $0x58] sm:$0xff] %v401
    %570 = vst [vmem:[#allocation5 + $0x60] sm:$0xff] %v403
    %571 = vst.msk [vmem:[#allocation5 + $0x68] sm:$0xff] %vm563, %v519
    %572 = vst [vmem:[#allocation5 + $0x70] sm:$0xff] %v169
    %573 = vst [vmem:[#allocation5 + $0x78] sm:$0xff] %v171
    %574 = vst [vmem:[#allocation5 + $0x80] sm:$0xff] %v288
    %575 = vst [vmem:[#allocation5 + $0x88] sm:$0xff] %v290
    %576 = vst [vmem:[#allocation5 + $0x90] sm:$0xff] %v407
    %577 = vst [vmem:[#allocation5 + $0x98] sm:$0xff] %v409
    %578 = vst.msk [vmem:[#allocation5 + $0xa0] sm:$0xff] %vm563, %v524
    %579 = vst [vmem:[#allocation5 + $0xa8] sm:$0xff] %v175
    %580 = vst [vmem:[#allocation5 + $0xb0] sm:$0xff] %v177
    %581 = vst [vmem:[#allocation5 + $0xb8] sm:$0xff] %v294
    %582 = vst [vmem:[#allocation5 + $0xc0] sm:$0xff] %v296
    %583 = vst [vmem:[#allocation5 + $0xc8] sm:$0xff] %v413
    %584 = vst [vmem:[#allocation5 + $0xd0] sm:$0xff] %v415
    %585 = vst.msk [vmem:[#allocation5 + $0xd8] sm:$0xff] %vm563, %v529
    %586 = vst [vmem:[#allocation5 + $0xe0] sm:$0xff] %v181
    %587 = vst [vmem:[#allocation5 + $0xe8] sm:$0xff] %v183
    %588 = vst [vmem:[#allocation5 + $0xf0] sm:$0xff] %v300
    %589 = vst [vmem:[#allocation5 + $0xf8] sm:$0xff] %v302
    %590 = vst [vmem:[#allocation5 + $0x100] sm:$0xff] %v419
    %591 = vst [vmem:[#allocation5 + $0x108] sm:$0xff] %v421
    %592 = vst.msk [vmem:[#allocation5 + $0x110] sm:$0xff] %vm563, %v534
    %593 = vst [vmem:[#allocation5 + $0x118] sm:$0xff] %v187
    %594 = vst [vmem:[#allocation5 + $0x120] sm:$0xff] %v189
    %595 = vst [vmem:[#allocation5 + $0x128] sm:$0xff] %v306
    %596 = vst [vmem:[#allocation5 + $0x130] sm:$0xff] %v308
    %597 = vst [vmem:[#allocation5 + $0x138] sm:$0xff] %v425
    %598 = vst [vmem:[#allocation5 + $0x140] sm:$0xff] %v427
    %599 = vst.msk [vmem:[#allocation5 + $0x148] sm:$0xff] %vm563, %v539
    %600 = vst [vmem:[#allocation5 + $0x150] sm:$0xff] %v193
    %601 = vst [vmem:[#allocation5 + $0x158] sm:$0xff] %v195
    %602 = vst [vmem:[#allocation5 + $0x160] sm:$0xff] %v312
    %603 = vst [vmem:[#allocation5 + $0x168] sm:$0xff] %v314
    %604 = vst [vmem:[#allocation5 + $0x170] sm:$0xff] %v431
    %605 = vst [vmem:[#allocation5 + $0x178] sm:$0xff] %v433
    %606 = vst.msk [vmem:[#allocation5 + $0x180] sm:$0xff] %vm563, %v544
    %607 = vst [vmem:[#allocation5 + $0x188] sm:$0xff] %v199
    %608 = vst [vmem:[#allocation5 + $0x190] sm:$0xff] %v201
    %609 = vst [vmem:[#allocation5 + $0x198] sm:$0xff] %v318
    %610 = vst [vmem:[#allocation5 + $0x1a0] sm:$0xff] %v320
    %611 = vst [vmem:[#allocation5 + $0x1a8] sm:$0xff] %v437
    %612 = vst [vmem:[#allocation5 + $0x1b0] sm:$0xff] %v439
    %613 = vst.msk [vmem:[#allocation5 + $0x1b8] sm:$0xff] %vm563, %v549
    %614 = vst [vmem:[#allocation5 + $0x1c0] sm:$0xff] %v205
    %615 = vst [vmem:[#allocation5 + $0x1c8] sm:$0xff] %v207
    %616 = vst [vmem:[#allocation5 + $0x1d0] sm:$0xff] %v324
    %617 = vst [vmem:[#allocation5 + $0x1d8] sm:$0xff] %v326
    %618 = vst [vmem:[#allocation5 + $0x1e0] sm:$0xff] %v443
    %619 = vst [vmem:[#allocation5 + $0x1e8] sm:$0xff] %v445
    %620 = vst.msk [vmem:[#allocation5 + $0x1f0] sm:$0xff] %vm563, %v554
    %v621 = vadd.f32 %v157, %v159
    %v622 = vadd.f32 %v621, %v276
    %v623 = vadd.f32 %v622, %v278
    %v624 = vadd.f32 %v623, %v395
    %v625 = vadd.f32 %v624, %v397
    %v626 = vsel %vm563, %v514, 0.0
    %v627 = vadd.f32 %v625, %v626
    %628 = vadd.xlane.f32.xlu0 %v627
    %v629 = vpop.xlane.xlu0 %628
    %v630 = vadd.f32 %v163, %v165
    %v631 = vadd.f32 %v630, %v282
    %v632 = vadd.f32 %v631, %v284
    %v633 = vadd.f32 %v632, %v401
    %v634 = vadd.f32 %v633, %v403
    %v635 = vsel %vm563, %v519, 0.0
    %v636 = vadd.f32 %v634, %v635
    %637 = vadd.xlane.f32.xlu0 %v636
    %v638 = vpop.xlane.xlu0 %637
    %v639 = vadd.f32 %v169, %v171
    %v640 = vadd.f32 %v639, %v288
    %v641 = vadd.f32 %v640, %v290
    %v642 = vadd.f32 %v641, %v407
    %v643 = vadd.f32 %v642, %v409
    %v644 = vsel %vm563, %v524, 0.0
    %v645 = vadd.f32 %v643, %v644
    %646 = vadd.xlane.f32.xlu0 %v645
    %v647 = vpop.xlane.xlu0 %646
    %v648 = vadd.f32 %v175, %v177
    %v649 = vadd.f32 %v648, %v294
    %v650 = vadd.f32 %v649, %v296
    %v651 = vadd.f32 %v650, %v413
    %v652 = vadd.f32 %v651, %v415
    %v653 = vsel %vm563, %v529, 0.0
    %v654 = vadd.f32 %v652, %v653
    %655 = vadd.xlane.f32.xlu0 %v654
    %v656 = vpop.xlane.xlu0 %655
    %v657 = vadd.f32 %v181, %v183
    %v658 = vadd.f32 %v657, %v300
    %v659 = vadd.f32 %v658, %v302
    %v660 = vadd.f32 %v659, %v419
    %v661 = vadd.f32 %v660, %v421
    %v662 = vsel %vm563, %v534, 0.0
    %v663 = vadd.f32 %v661, %v662
    %664 = vadd.xlane.f32.xlu0 %v663
    %v665 = vpop.xlane.xlu0 %664
    %v666 = vadd.f32 %v187, %v189
    %v667 = vadd.f32 %v666, %v306
    %v668 = vadd.f32 %v667, %v308
    %v669 = vadd.f32 %v668, %v425
    %v670 = vadd.f32 %v669, %v427
    %v671 = vsel %vm563, %v539, 0.0
    %v672 = vadd.f32 %v670, %v671
    %673 = vadd.xlane.f32.xlu0 %v672
    %v674 = vpop.xlane.xlu0 %673
    %v675 = vadd.f32 %v193, %v195
    %v676 = vadd.f32 %v675, %v312
    %v677 = vadd.f32 %v676, %v314
    %v678 = vadd.f32 %v677, %v431
    %v679 = vadd.f32 %v678, %v433
    %v680 = vsel %vm563, %v544, 0.0
    %v681 = vadd.f32 %v679, %v680
    %682 = vadd.xlane.f32.xlu0 %v681
    %v683 = vpop.xlane.xlu0 %682
    %v684 = vadd.f32 %v199, %v201
    %v685 = vadd.f32 %v684, %v318
    %v686 = vadd.f32 %v685, %v320
    %v687 = vadd.f32 %v686, %v437
    %v688 = vadd.f32 %v687, %v439
    %v689 = vsel %vm563, %v549, 0.0
    %v690 = vadd.f32 %v688, %v689
    %691 = vadd.xlane.f32.xlu0 %v690
    %v692 = vpop.xlane.xlu0 %691
    %v693 = vadd.f32 %v205, %v207
    %v694 = vadd.f32 %v693, %v324
    %v695 = vadd.f32 %v694, %v326
    %v696 = vadd.f32 %v695, %v443
    %v697 = vadd.f32 %v696, %v445
    %v698 = vsel %vm563, %v554, 0.0
    %v699 = vadd.f32 %v697, %v698
    %700 = vadd.xlane.f32.xlu0 %v699
    %v701 = vpop.xlane.xlu0 %700
    %v702 = vadd.f32 %v629, 0.0
    %v703 = vadd.f32 %v638, 0.0
    %v704 = vadd.f32 %v647, 0.0
    %v705 = vadd.f32 %v656, 0.0
    %v706 = vadd.f32 %v665, 0.0
    %v707 = vadd.f32 %v674, 0.0
    %v708 = vadd.f32 %v683, 0.0
    %v709 = vadd.f32 %v692, 0.0
    %v710 = vadd.f32 %v701, 0.0
    %s711 = scalar_lea.vmem [#allocation2], 168
    %v712 = vld [vmem:[%s711] sm:$0xff]
    %v713 = vld [vmem:[%s711 + $0x8] sm:$0xff]
    %v714 = vld [vmem:[%s711 + $0x10] sm:$0xff]
    %v715 = vld [vmem:[%s711 + $0x18] sm:$0xff]
    %v716 = vld [vmem:[%s711 + $0x20] sm:$0xff]
    %v717 = vld [vmem:[%s711 + $0x28] sm:$0xff]
    %v718 = vld [vmem:[%s711 + $0x30] sm:$0xff]
    %v719 = vld [vmem:[%s711 + $0x38] sm:$0xff]
    %v720 = vld [vmem:[%s711 + $0x40] sm:$0xff]
    %v721 = vld [vmem:[%s711 + $0x48] sm:$0xff]
    %v722 = vld [vmem:[%s711 + $0x50] sm:$0xff]
    %v723 = vld [vmem:[%s711 + $0x58] sm:$0xff]
    %v724 = vld [vmem:[%s711 + $0x60] sm:$0xff]
    %v725 = vld [vmem:[%s711 + $0x68] sm:$0xff]
    %v726 = vld [vmem:[%s711 + $0x70] sm:$0xff]
    %v727 = vld [vmem:[%s711 + $0x78] sm:$0xff]
    %v728 = vld [vmem:[%s711 + $0x80] sm:$0xff]
    %v729 = vld [vmem:[%s711 + $0x88] sm:$0xff]
    %v730 = vld [vmem:[%s711 + $0x90] sm:$0xff]
    %v731 = vld [vmem:[%s711 + $0x98] sm:$0xff]
    %v732 = vld [vmem:[%s711 + $0xa0] sm:$0xff]
    %733 = vmatprep.subr.mxu0 %v713
    %734 = vmatpush1.msra.mxu0 %v712
    %735 = vmatprep.subr.mxu0 %v720
    %736 = vmatpush1.msra.mxu0 %v719
    %737 = vmatprep.subr.mxu0 %v727
    %738 = vmatpush1.msra.mxu0 %v726
    %739 = vmatprep.subr.mxu0 0.0
    %740 = vmatpush1.msra.mxu0 0.0
    %741 = vmatprep.subr.mxu0 0.0
    %742 = vmatpush1.msra.mxu0 0.0
    %743 = vmatprep.subr.mxu0 0.0
    %744 = vmatpush1.msra.mxu0 0.0
    %745 = vmatprep.subr.mxu0 0.0
    %746 = vmatpush1.msra.mxu0 0.0
    %747 = vmatprep.subr.mxu0 0.0
    %748 = vmatpush1.msra.mxu0 0.0
    %749 = vmatprep.subr.mxu0 0.0
    %750 = vmatpush1.msra.mxu0 0.0
    %751 = vmatprep.subr.mxu0 0.0
    %752 = vmatpush1.msra.mxu0 0.0
    %753 = vmatprep.subr.mxu0 0.0
    %754 = vmatpush1.msra.mxu0 0.0
    %755 = vmatprep.subr.mxu0 0.0
    %756 = vmatpush1.msra.mxu0 0.0
    %757 = vmatprep.subr.mxu0 0.0
    %758 = vmatpush1.msra.mxu0 0.0
    %759 = vmatprep.subr.mxu0 0.0
    %760 = vmatpush1.msra.mxu0 0.0
    %761 = vmatprep.subr.mxu0 0.0
    %762 = vmatpush1.msra.mxu0 0.0
    %763 = vmatprep.subr.mxu0 0.0
    %764 = vmatpush1.msra.mxu0 0.0
    %765 = vmatprep.subr.mxu0 0.0
    %766 = vmatpush1.msra.mxu0 0.0
    %767 = vmatprep.subr.mxu0 0.0
    %768 = vmatpush1.msra.mxu0 0.0
    %769 = vmatprep.subr.mxu0 0.0
    %770 = vmatpush1.msra.mxu0 0.0
    %771 = vmatprep.subr.mxu0 0.0
    %772 = vmatpush1.msra.mxu0 0.0
    %773 = vmatprep.subr.mxu0 0.0
    %774 = vmatpush1.msra.mxu0 0.0
    %775 = vmatprep.subr.mxu0 0.0
    %776 = vmatpush1.msra.mxu0 0.0
    %777 = vmatprep.subr.mxu0 0.0
    %778 = vmatpush1.msra.mxu0 0.0
    %779 = vmatprep.subr.mxu0 0.0
    %780 = vmatpush1.msra.mxu0 0.0
    %781 = vmatprep.subr.mxu0 0.0
    %782 = vmatpush1.msra.mxu0 0.0
    %783 = vmatprep.subr.mxu0 0.0
    %784 = vmatpush1.msra.mxu0 0.0
    %785 = vmatprep.subr.mxu0 0.0
    %786 = vmatpush1.msra.mxu0 0.0
    %787 = vmatprep.subr.mxu0 0.0
    %788 = vmatpush1.msra.mxu0 0.0
    %789 = vmatprep.subr.mxu0 0.0
    %790 = vmatpush1.msra.mxu0 0.0
    %791 = vmatprep.subr.mxu0 0.0
    %792 = vmatpush1.msra.mxu0 0.0
    %793 = vmatprep.subr.mxu0 0.0
    %794 = vmatpush1.msra.mxu0 0.0
    %795 = vmatprep.subr.mxu0 0.0
    %796 = vmatpush1.msra.mxu0 0.0
    %797 = vmatprep.mubr.f32.mxu0 0.0
    %798 = vmatmul.mubr.f32.gmra.mrb[0].mxu0 %v64
    %v799 = vpop.f32.mrb[0].mxu0
    %v800 = vadd.f32 0.0, %v799
    %v801 = vpop.f32.mrb[0].mxu0
    %v802 = vadd.f32 0.0, %v801
    %803 = vmatprep.mubr.f32.mxu0 0.0
    %804 = vmatmul.mubr.f32.gmra.mrb[0].mxu0 %v67
    %v805 = vpop.f32.mrb[0].mxu0
    %v806 = vadd.f32 0.0, %v805
    %v807 = vpop.f32.mrb[0].mxu0
    %v808 = vadd.f32 0.0, %v807
    %809 = vmatprep.mubr.f32.mxu0 0.0
    %810 = vmatmul.mubr.f32.gmra.mrb[0].mxu0 %v70
    %v811 = vpop.f32.mrb[0].mxu0
    %v812 = vadd.f32 0.0, %v811
    %v813 = vpop.f32.mrb[0].mxu0
    %v814 = vadd.f32 0.0, %v813
    %815 = vmatprep.mubr.f32.mxu0 0.0
    %816 = vmatmul.mubr.f32.gmra.mrb[0].mxu0 %v73
    %v817 = vpop.f32.mrb[0].mxu0
    %v818 = vadd.f32 0.0, %v817
    %v819 = vpop.f32.mrb[0].mxu0
    %v820 = vadd.f32 0.0, %v819
    %821 = vmatprep.mubr.f32.mxu0 0.0
    %822 = vmatmul.mubr.f32.gmra.mrb[0].mxu0 %v76
    %v823 = vpop.f32.mrb[0].mxu0
    %v824 = vadd.f32 0.0, %v823
    %v825 = vpop.f32.mrb[0].mxu0
    %v826 = vadd.f32 0.0, %v825
    %827 = vmatprep.mubr.f32.mxu0 0.0
    %828 = vmatmul.mubr.f32.gmra.mrb[0].mxu0 %v79
    %v829 = vpop.f32.mrb[0].mxu0
    %v830 = vadd.f32 0.0, %v829
    %v831 = vpop.f32.mrb[0].mxu0
    %v832 = vadd.f32 0.0, %v831
    %833 = vmatprep.mubr.f32.mxu0 0.0
    %834 = vmatmul.mubr.f32.gmra.mrb[0].mxu0 %v82
    %v835 = vpop.f32.mrb[0].mxu0
    %v836 = vadd.f32 0.0, %v835
    %v837 = vpop.f32.mrb[0].mxu0
    %v838 = vadd.f32 0.0, %v837
    %839 = vmatprep.mubr.f32.mxu0 0.0
    %840 = vmatmul.mubr.f32.gmra.mrb[0].mxu0 %v85
    %v841 = vpop.f32.mrb[0].mxu0
    %v842 = vadd.f32 0.0, %v841
    %v843 = vpop.f32.mrb[0].mxu0
    %v844 = vadd.f32 0.0, %v843
    %845 = vmatprep.mubr.f32.mxu0 0.0
    %846 = vmatmul.mubr.f32.gmra.mrb[0].mxu0 %v88
    %v847 = vpop.f32.mrb[0].mxu0
    %v848 = vadd.f32 0.0, %v847
    %v849 = vpop.f32.mrb[0].mxu0
    %v850 = vadd.f32 0.0, %v849
    %851 = vdwg.mxu0
    %852 = vmatprep.subr.mxu0 %v715
    %853 = vmatpush1.msra.mxu0 %v714
    %854 = vmatprep.subr.mxu0 %v722
    %855 = vmatpush1.msra.mxu0 %v721
    %856 = vmatprep.subr.mxu0 %v729
    %857 = vmatpush1.msra.mxu0 %v728
    %858 = vmatprep.subr.mxu0 0.0
    %859 = vmatpush1.msra.mxu0 0.0
    %860 = vmatprep.subr.mxu0 0.0
    %861 = vmatpush1.msra.mxu0 0.0
    %862 = vmatprep.subr.mxu0 0.0
    %863 = vmatpush1.msra.mxu0 0.0
    %864 = vmatprep.subr.mxu0 0.0
    %865 = vmatpush1.msra.mxu0 0.0
    %866 = vmatprep.subr.mxu0 0.0
    %867 = vmatpush1.msra.mxu0 0.0
    %868 = vmatprep.subr.mxu0 0.0
    %869 = vmatpush1.msra.mxu0 0.0
    %870 = vmatprep.subr.mxu0 0.0
    %871 = vmatpush1.msra.mxu0 0.0
    %872 = vmatprep.subr.mxu0 0.0
    %873 = vmatpush1.msra.mxu0 0.0
    %874 = vmatprep.subr.mxu0 0.0
    %875 = vmatpush1.msra.mxu0 0.0
    %876 = vmatprep.subr.mxu0 0.0
    %877 = vmatpush1.msra.mxu0 0.0
    %878 = vmatprep.subr.mxu0 0.0
    %879 = vmatpush1.msra.mxu0 0.0
    %880 = vmatprep.subr.mxu0 0.0
    %881 = vmatpush1.msra.mxu0 0.0
    %882 = vmatprep.subr.mxu0 0.0
    %883 = vmatpush1.msra.mxu0 0.0
    %884 = vmatprep.subr.mxu0 0.0
    %885 = vmatpush1.msra.mxu0 0.0
    %886 = vmatprep.subr.mxu0 0.0
    %887 = vmatpush1.msra.mxu0 0.0
    %888 = vmatprep.subr.mxu0 0.0
    %889 = vmatpush1.msra.mxu0 0.0
    %890 = vmatprep.subr.mxu0 0.0
    %891 = vmatpush1.msra.mxu0 0.0
    %892 = vmatprep.subr.mxu0 0.0
    %893 = vmatpush1.msra.mxu0 0.0
    %894 = vmatprep.subr.mxu0 0.0
    %895 = vmatpush1.msra.mxu0 0.0
    %896 = vmatprep.subr.mxu0 0.0
    %897 = vmatpush1.msra.mxu0 0.0
    %898 = vmatprep.subr.mxu0 0.0
    %899 = vmatpush1.msra.mxu0 0.0
    %900 = vmatprep.subr.mxu0 0.0
    %901 = vmatpush1.msra.mxu0 0.0
    %902 = vmatprep.subr.mxu0 0.0
    %903 = vmatpush1.msra.mxu0 0.0
    %904 = vmatprep.subr.mxu0 0.0
    %905 = vmatpush1.msra.mxu0 0.0
    %906 = vmatprep.subr.mxu0 0.0
    %907 = vmatpush1.msra.mxu0 0.0
    %908 = vmatprep.subr.mxu0 0.0
    %909 = vmatpush1.msra.mxu0 0.0
    %910 = vmatprep.subr.mxu0 0.0
    %911 = vmatpush1.msra.mxu0 0.0
    %912 = vmatprep.subr.mxu0 0.0
    %913 = vmatpush1.msra.mxu0 0.0
    %914 = vmatprep.subr.mxu0 0.0
    %915 = vmatpush1.msra.mxu0 0.0
    %916 = vmatprep.mubr.f32.mxu0 0.0
    %917 = vmatmul.mubr.f32.gmra.mrb[0].mxu0 %v64
    %v918 = vpop.f32.mrb[0].mxu0
    %v919 = vadd.f32 0.0, %v918
    %v920 = vpop.f32.mrb[0].mxu0
    %v921 = vadd.f32 0.0, %v920
    %922 = vmatprep.mubr.f32.mxu0 0.0
    %923 = vmatmul.mubr.f32.gmra.mrb[0].mxu0 %v67
    %v924 = vpop.f32.mrb[0].mxu0
    %v925 = vadd.f32 0.0, %v924
    %v926 = vpop.f32.mrb[0].mxu0
    %v927 = vadd.f32 0.0, %v926
    %928 = vmatprep.mubr.f32.mxu0 0.0
    %929 = vmatmul.mubr.f32.gmra.mrb[0].mxu0 %v70
    %v930 = vpop.f32.mrb[0].mxu0
    %v931 = vadd.f32 0.0, %v930
    %v932 = vpop.f32.mrb[0].mxu0
    %v933 = vadd.f32 0.0, %v932
    %934 = vmatprep.mubr.f32.mxu0 0.0
    %935 = vmatmul.mubr.f32.gmra.mrb[0].mxu0 %v73
    %v936 = vpop.f32.mrb[0].mxu0
    %v937 = vadd.f32 0.0, %v936
    %v938 = vpop.f32.mrb[0].mxu0
    %v939 = vadd.f32 0.0, %v938
    %940 = vmatprep.mubr.f32.mxu0 0.0
    %941 = vmatmul.mubr.f32.gmra.mrb[0].mxu0 %v76
    %v942 = vpop.f32.mrb[0].mxu0
    %v943 = vadd.f32 0.0, %v942
    %v944 = vpop.f32.mrb[0].mxu0
    %v945 = vadd.f32 0.0, %v944
    %946 = vmatprep.mubr.f32.mxu0 0.0
    %947 = vmatmul.mubr.f32.gmra.mrb[0].mxu0 %v79
    %v948 = vpop.f32.mrb[0].mxu0
    %v949 = vadd.f32 0.0, %v948
    %v950 = vpop.f32.mrb[0].mxu0
    %v951 = vadd.f32 0.0, %v950
    %952 = vmatprep.mubr.f32.mxu0 0.0
    %953 = vmatmul.mubr.f32.gmra.mrb[0].mxu0 %v82
    %v954 = vpop.f32.mrb[0].mxu0
    %v955 = vadd.f32 0.0, %v954
    %v956 = vpop.f32.mrb[0].mxu0
    %v957 = vadd.f32 0.0, %v956
    %958 = vmatprep.mubr.f32.mxu0 0.0
    %959 = vmatmul.mubr.f32.gmra.mrb[0].mxu0 %v85
    %v960 = vpop.f32.mrb[0].mxu0
    %v961 = vadd.f32 0.0, %v960
    %v962 = vpop.f32.mrb[0].mxu0
    %v963 = vadd.f32 0.0, %v962
    %964 = vmatprep.mubr.f32.mxu0 0.0
    %965 = vmatmul.mubr.f32.gmra.mrb[0].mxu0 %v88
    %v966 = vpop.f32.mrb[0].mxu0
    %v967 = vadd.f32 0.0, %v966
    %v968 = vpop.f32.mrb[0].mxu0
    %v969 = vadd.f32 0.0, %v968
    %970 = vdwg.mxu0
    %971 = vmatprep.subr.mxu0 %v717
    %972 = vmatpush1.msra.mxu0 %v716
    %973 = vmatprep.subr.mxu0 %v724
    %974 = vmatpush1.msra.mxu0 %v723
    %975 = vmatprep.subr.mxu0 %v731
    %976 = vmatpush1.msra.mxu0 %v730
    %977 = vmatprep.subr.mxu0 0.0
    %978 = vmatpush1.msra.mxu0 0.0
    %979 = vmatprep.subr.mxu0 0.0
    %980 = vmatpush1.msra.mxu0 0.0
    %981 = vmatprep.subr.mxu0 0.0
    %982 = vmatpush1.msra.mxu0 0.0
    %983 = vmatprep.subr.mxu0 0.0
    %984 = vmatpush1.msra.mxu0 0.0
    %985 = vmatprep.subr.mxu0 0.0
    %986 = vmatpush1.msra.mxu0 0.0
    %987 = vmatprep.subr.mxu0 0.0
    %988 = vmatpush1.msra.mxu0 0.0
    %989 = vmatprep.subr.mxu0 0.0
    %990 = vmatpush1.msra.mxu0 0.0
    %991 = vmatprep.subr.mxu0 0.0
    %992 = vmatpush1.msra.mxu0 0.0
    %993 = vmatprep.subr.mxu0 0.0
    %994 = vmatpush1.msra.mxu0 0.0
    %995 = vmatprep.subr.mxu0 0.0
    %996 = vmatpush1.msra.mxu0 0.0
    %997 = vmatprep.subr.mxu0 0.0
    %998 = vmatpush1.msra.mxu0 0.0
    %999 = vmatprep.subr.mxu0 0.0
    %1000 = vmatpush1.msra.mxu0 0.0
    %1001 = vmatprep.subr.mxu0 0.0
    %1002 = vmatpush1.msra.mxu0 0.0
    %1003 = vmatprep.subr.mxu0 0.0
    %1004 = vmatpush1.msra.mxu0 0.0
    %1005 = vmatprep.subr.mxu0 0.0
    %1006 = vmatpush1.msra.mxu0 0.0
    %1007 = vmatprep.subr.mxu0 0.0
    %1008 = vmatpush1.msra.mxu0 0.0
    %1009 = vmatprep.subr.mxu0 0.0
    %1010 = vmatpush1.msra.mxu0 0.0
    %1011 = vmatprep.subr.mxu0 0.0
    %1012 = vmatpush1.msra.mxu0 0.0
    %1013 = vmatprep.subr.mxu0 0.0
    %1014 = vmatpush1.msra.mxu0 0.0
    %1015 = vmatprep.subr.mxu0 0.0
    %1016 = vmatpush1.msra.mxu0 0.0
    %1017 = vmatprep.subr.mxu0 0.0
    %1018 = vmatpush1.msra.mxu0 0.0
    %1019 = vmatprep.subr.mxu0 0.0
    %1020 = vmatpush1.msra.mxu0 0.0
    %1021 = vmatprep.subr.mxu0 0.0
    %1022 = vmatpush1.msra.mxu0 0.0
    %1023 = vmatprep.subr.mxu0 0.0
    %1024 = vmatpush1.msra.mxu0 0.0
    %1025 = vmatprep.subr.mxu0 0.0
    %1026 = vmatpush1.msra.mxu0 0.0
    %1027 = vmatprep.subr.mxu0 0.0
    %1028 = vmatpush1.msra.mxu0 0.0
    %1029 = vmatprep.subr.mxu0 0.0
    %1030 = vmatpush1.msra.mxu0 0.0
    %1031 = vmatprep.subr.mxu0 0.0
    %1032 = vmatpush1.msra.mxu0 0.0
    %1033 = vmatprep.subr.mxu0 0.0
    %1034 = vmatpush1.msra.mxu0 0.0
    %1035 = vmatprep.mubr.f32.mxu0 0.0
    %1036 = vmatmul.mubr.f32.gmra.mrb[0].mxu0 %v64
    %v1037 = vpop.f32.mrb[0].mxu0
    %v1038 = vadd.f32 0.0, %v1037
    %v1039 = vpop.f32.mrb[0].mxu0
    %v1040 = vadd.f32 0.0, %v1039
    %1041 = vmatprep.mubr.f32.mxu0 0.0
    %1042 = vmatmul.mubr.f32.gmra.mrb[0].mxu0 %v67
    %v1043 = vpop.f32.mrb[0].mxu0
    %v1044 = vadd.f32 0.0, %v1043
    %v1045 = vpop.f32.mrb[0].mxu0
    %v1046 = vadd.f32 0.0, %v1045
    %1047 = vmatprep.mubr.f32.mxu0 0.0
    %1048 = vmatmul.mubr.f32.gmra.mrb[0].mxu0 %v70
    %v1049 = vpop.f32.mrb[0].mxu0
    %v1050 = vadd.f32 0.0, %v1049
    %v1051 = vpop.f32.mrb[0].mxu0
    %v1052 = vadd.f32 0.0, %v1051
    %1053 = vmatprep.mubr.f32.mxu0 0.0
    %1054 = vmatmul.mubr.f32.gmra.mrb[0].mxu0 %v73
    %v1055 = vpop.f32.mrb[0].mxu0
    %v1056 = vadd.f32 0.0, %v1055
    %v1057 = vpop.f32.mrb[0].mxu0
    %v1058 = vadd.f32 0.0, %v1057
    %1059 = vmatprep.mubr.f32.mxu0 0.0
    %1060 = vmatmul.mubr.f32.gmra.mrb[0].mxu0 %v76
    %v1061 = vpop.f32.mrb[0].mxu0
    %v1062 = vadd.f32 0.0, %v1061
    %v1063 = vpop.f32.mrb[0].mxu0
    %v1064 = vadd.f32 0.0, %v1063
    %1065 = vmatprep.mubr.f32.mxu0 0.0
    %1066 = vmatmul.mubr.f32.gmra.mrb[0].mxu0 %v79
    %v1067 = vpop.f32.mrb[0].mxu0
    %v1068 = vadd.f32 0.0, %v1067
    %v1069 = vpop.f32.mrb[0].mxu0
    %v1070 = vadd.f32 0.0, %v1069
    %1071 = vmatprep.mubr.f32.mxu0 0.0
    %1072 = vmatmul.mubr.f32.gmra.mrb[0].mxu0 %v82
    %v1073 = vpop.f32.mrb[0].mxu0
    %v1074 = vadd.f32 0.0, %v1073
    %v1075 = vpop.f32.mrb[0].mxu0
    %v1076 = vadd.f32 0.0, %v1075
    %1077 = vmatprep.mubr.f32.mxu0 0.0
    %1078 = vmatmul.mubr.f32.gmra.mrb[0].mxu0 %v85
    %v1079 = vpop.f32.mrb[0].mxu0
    %v1080 = vadd.f32 0.0, %v1079
    %v1081 = vpop.f32.mrb[0].mxu0
    %v1082 = vadd.f32 0.0, %v1081
    %1083 = vmatprep.mubr.f32.mxu0 0.0
    %1084 = vmatmul.mubr.f32.gmra.mrb[0].mxu0 %v88
    %v1085 = vpop.f32.mrb[0].mxu0
    %v1086 = vadd.f32 0.0, %v1085
    %v1087 = vpop.f32.mrb[0].mxu0
    %v1088 = vadd.f32 0.0, %v1087
    %1089 = vdwg.mxu0
    %1090 = vmatprep.subr.mxu0 0.0
    %1091 = vmatpush1.msra.mxu0 %v718
    %1092 = vmatprep.subr.mxu0 0.0
    %1093 = vmatpush1.msra.mxu0 %v725
    %1094 = vmatprep.subr.mxu0 0.0
    %1095 = vmatpush1.msra.mxu0 %v732
    %1096 = vmatprep.subr.mxu0 0.0
    %1097 = vmatpush1.msra.mxu0 0.0
    %1098 = vmatprep.subr.mxu0 0.0
    %1099 = vmatpush1.msra.mxu0 0.0
    %1100 = vmatprep.subr.mxu0 0.0
    %1101 = vmatpush1.msra.mxu0 0.0
    %1102 = vmatprep.subr.mxu0 0.0
    %1103 = vmatpush1.msra.mxu0 0.0
    %1104 = vmatprep.subr.mxu0 0.0
    %1105 = vmatpush1.msra.mxu0 0.0
    %1106 = vmatprep.subr.mxu0 0.0
    %1107 = vmatpush1.msra.mxu0 0.0
    %1108 = vmatprep.subr.mxu0 0.0
    %1109 = vmatpush1.msra.mxu0 0.0
    %1110 = vmatprep.subr.mxu0 0.0
    %1111 = vmatpush1.msra.mxu0 0.0
    %1112 = vmatprep.subr.mxu0 0.0
    %1113 = vmatpush1.msra.mxu0 0.0
    %1114 = vmatprep.subr.mxu0 0.0
    %1115 = vmatpush1.msra.mxu0 0.0
    %1116 = vmatprep.subr.mxu0 0.0
    %1117 = vmatpush1.msra.mxu0 0.0
    %1118 = vmatprep.subr.mxu0 0.0
    %1119 = vmatpush1.msra.mxu0 0.0
    %1120 = vmatprep.subr.mxu0 0.0
    %1121 = vmatpush1.msra.mxu0 0.0
    %1122 = vmatprep.subr.mxu0 0.0
    %1123 = vmatpush1.msra.mxu0 0.0
    %1124 = vmatprep.subr.mxu0 0.0
    %1125 = vmatpush1.msra.mxu0 0.0
    %1126 = vmatprep.subr.mxu0 0.0
    %1127 = vmatpush1.msra.mxu0 0.0
    %1128 = vmatprep.subr.mxu0 0.0
    %1129 = vmatpush1.msra.mxu0 0.0
    %1130 = vmatprep.subr.mxu0 0.0
    %1131 = vmatpush1.msra.mxu0 0.0
    %1132 = vmatprep.subr.mxu0 0.0
    %1133 = vmatpush1.msra.mxu0 0.0
    %1134 = vmatprep.subr.mxu0 0.0
    %1135 = vmatpush1.msra.mxu0 0.0
    %1136 = vmatprep.subr.mxu0 0.0
    %1137 = vmatpush1.msra.mxu0 0.0
    %1138 = vmatprep.subr.mxu0 0.0
    %1139 = vmatpush1.msra.mxu0 0.0
    %1140 = vmatprep.subr.mxu0 0.0
    %1141 = vmatpush1.msra.mxu0 0.0
    %1142 = vmatprep.subr.mxu0 0.0
    %1143 = vmatpush1.msra.mxu0 0.0
    %1144 = vmatprep.subr.mxu0 0.0
    %1145 = vmatpush1.msra.mxu0 0.0
    %1146 = vmatprep.subr.mxu0 0.0
    %1147 = vmatpush1.msra.mxu0 0.0
    %1148 = vmatprep.subr.mxu0 0.0
    %1149 = vmatpush1.msra.mxu0 0.0
    %1150 = vmatprep.subr.mxu0 0.0
    %1151 = vmatpush1.msra.mxu0 0.0
    %1152 = vmatprep.subr.mxu0 0.0
    %1153 = vmatpush1.msra.mxu0 0.0
    %1154 = vmatprep.mubr.f32.mxu0 0.0
    %1155 = vmatmul.mubr.f32.gmra.mrb[0].mxu0 %v64
    %v1156 = vpop.f32.mrb[0].mxu0
    %v1157 = vadd.f32 0.0, %v1156
    %v1158 = vpop.f32.mrb[0].mxu0
    %1159 = vmatprep.mubr.f32.mxu0 0.0
    %1160 = vmatmul.mubr.f32.gmra.mrb[0].mxu0 %v67
    %v1161 = vpop.f32.mrb[0].mxu0
    %v1162 = vadd.f32 0.0, %v1161
    %v1163 = vpop.f32.mrb[0].mxu0
    %1164 = vmatprep.mubr.f32.mxu0 0.0
    %1165 = vmatmul.mubr.f32.gmra.mrb[0].mxu0 %v70
    %v1166 = vpop.f32.mrb[0].mxu0
    %v1167 = vadd.f32 0.0, %v1166
    %v1168 = vpop.f32.mrb[0].mxu0
    %1169 = vmatprep.mubr.f32.mxu0 0.0
    %1170 = vmatmul.mubr.f32.gmra.mrb[0].mxu0 %v73
    %v1171 = vpop.f32.mrb[0].mxu0
    %v1172 = vadd.f32 0.0, %v1171
    %v1173 = vpop.f32.mrb[0].mxu0
    %1174 = vmatprep.mubr.f32.mxu0 0.0
    %1175 = vmatmul.mubr.f32.gmra.mrb[0].mxu0 %v76
    %v1176 = vpop.f32.mrb[0].mxu0
    %v1177 = vadd.f32 0.0, %v1176
    %v1178 = vpop.f32.mrb[0].mxu0
    %1179 = vmatprep.mubr.f32.mxu0 0.0
    %1180 = vmatmul.mubr.f32.gmra.mrb[0].mxu0 %v79
    %v1181 = vpop.f32.mrb[0].mxu0
    %v1182 = vadd.f32 0.0, %v1181
    %v1183 = vpop.f32.mrb[0].mxu0
    %1184 = vmatprep.mubr.f32.mxu0 0.0
    %1185 = vmatmul.mubr.f32.gmra.mrb[0].mxu0 %v82
    %v1186 = vpop.f32.mrb[0].mxu0
    %v1187 = vadd.f32 0.0, %v1186
    %v1188 = vpop.f32.mrb[0].mxu0
    %1189 = vmatprep.mubr.f32.mxu0 0.0
    %1190 = vmatmul.mubr.f32.gmra.mrb[0].mxu0 %v85
    %v1191 = vpop.f32.mrb[0].mxu0
    %v1192 = vadd.f32 0.0, %v1191
    %v1193 = vpop.f32.mrb[0].mxu0
    %1194 = vmatprep.mubr.f32.mxu0 0.0
    %1195 = vmatmul.mubr.f32.gmra.mrb[0].mxu0 %v88
    %v1196 = vpop.f32.mrb[0].mxu0
    %v1197 = vadd.f32 0.0, %v1196
    %v1198 = vpop.f32.mrb[0].mxu0
    %1199 = vdwg.mxu0
    %s1200 = scalar_lea.vmem [#allocation5], 504
    %1201 = vst [vmem:[%s1200] sm:$0xff] %v800
    %1202 = vst [vmem:[%s1200 + $0x8] sm:$0xff] %v802
    %1203 = vst [vmem:[%s1200 + $0x10] sm:$0xff] %v919
    %1204 = vst [vmem:[%s1200 + $0x18] sm:$0xff] %v921
    %1205 = vst [vmem:[%s1200 + $0x20] sm:$0xff] %v1038
    %1206 = vst [vmem:[%s1200 + $0x28] sm:$0xff] %v1040
    %1207 = vst.msk [vmem:[%s1200 + $0x30] sm:$0xff] %vm563, %v1157
    %1208 = vst [vmem:[%s1200 + $0x38] sm:$0xff] %v806
    %1209 = vst [vmem:[%s1200 + $0x40] sm:$0xff] %v808
    %1210 = vst [vmem:[%s1200 + $0x48] sm:$0xff] %v925
    %1211 = vst [vmem:[%s1200 + $0x50] sm:$0xff] %v927
    %1212 = vst [vmem:[%s1200 + $0x58] sm:$0xff] %v1044
    %1213 = vst [vmem:[%s1200 + $0x60] sm:$0xff] %v1046
    %1214 = vst.msk [vmem:[%s1200 + $0x68] sm:$0xff] %vm563, %v1162
    %1215 = vst [vmem:[%s1200 + $0x70] sm:$0xff] %v812
    %1216 = vst [vmem:[%s1200 + $0x78] sm:$0xff] %v814
    %1217 = vst [vmem:[%s1200 + $0x80] sm:$0xff] %v931
    %1218 = vst [vmem:[%s1200 + $0x88] sm:$0xff] %v933
    %1219 = vst [vmem:[%s1200 + $0x90] sm:$0xff] %v1050
    %1220 = vst [vmem:[%s1200 + $0x98] sm:$0xff] %v1052
    %1221 = vst.msk [vmem:[%s1200 + $0xa0] sm:$0xff] %vm563, %v1167
    %1222 = vst [vmem:[%s1200 + $0xa8] sm:$0xff] %v818
    %1223 = vst [vmem:[%s1200 + $0xb0] sm:$0xff] %v820
    %1224 = vst [vmem:[%s1200 + $0xb8] sm:$0xff] %v937
    %1225 = vst [vmem:[%s1200 + $0xc0] sm:$0xff] %v939
    %1226 = vst [vmem:[%s1200 + $0xc8] sm:$0xff] %v1056
    %1227 = vst [vmem:[%s1200 + $0xd0] sm:$0xff] %v1058
    %1228 = vst.msk [vmem:[%s1200 + $0xd8] sm:$0xff] %vm563, %v1172
    %1229 = vst [vmem:[%s1200 + $0xe0] sm:$0xff] %v824
    %1230 = vst [vmem:[%s1200 + $0xe8] sm:$0xff] %v826
    %1231 = vst [vmem:[%s1200 + $0xf0] sm:$0xff] %v943
    %1232 = vst [vmem:[%s1200 + $0xf8] sm:$0xff] %v945
    %1233 = vst [vmem:[%s1200 + $0x100] sm:$0xff] %v1062
    %1234 = vst [vmem:[%s1200 + $0x108] sm:$0xff] %v1064
    %1235 = vst.msk [vmem:[%s1200 + $0x110] sm:$0xff] %vm563, %v1177
    %1236 = vst [vmem:[%s1200 + $0x118] sm:$0xff] %v830
    %1237 = vst [vmem:[%s1200 + $0x120] sm:$0xff] %v832
    %1238 = vst [vmem:[%s1200 + $0x128] sm:$0xff] %v949
    %1239 = vst [vmem:[%s1200 + $0x130] sm:$0xff] %v951
    %1240 = vst [vmem:[%s1200 + $0x138] sm:$0xff] %v1068
    %1241 = vst [vmem:[%s1200 + $0x140] sm:$0xff] %v1070
    %1242 = vst.msk [vmem:[%s1200 + $0x148] sm:$0xff] %vm563, %v1182
    %1243 = vst [vmem:[%s1200 + $0x150] sm:$0xff] %v836
    %1244 = vst [vmem:[%s1200 + $0x158] sm:$0xff] %v838
    %1245 = vst [vmem:[%s1200 + $0x160] sm:$0xff] %v955
    %1246 = vst [vmem:[%s1200 + $0x168] sm:$0xff] %v957
    %1247 = vst [vmem:[%s1200 + $0x170] sm:$0xff] %v1074
    %1248 = vst [vmem:[%s1200 + $0x178] sm:$0xff] %v1076
    %1249 = vst.msk [vmem:[%s1200 + $0x180] sm:$0xff] %vm563, %v1187
    %1250 = vst [vmem:[%s1200 + $0x188] sm:$0xff] %v842
    %1251 = vst [vmem:[%s1200 + $0x190] sm:$0xff] %v844
    %1252 = vst [vmem:[%s1200 + $0x198] sm:$0xff] %v961
    %1253 = vst [vmem:[%s1200 + $0x1a0] sm:$0xff] %v963
    %1254 = vst [vmem:[%s1200 + $0x1a8] sm:$0xff] %v1080
    %1255 = vst [vmem:[%s1200 + $0x1b0] sm:$0xff] %v1082
    %1256 = vst.msk [vmem:[%s1200 + $0x1b8] sm:$0xff] %vm563, %v1192
    %1257 = vst [vmem:[%s1200 + $0x1c0] sm:$0xff] %v848
    %1258 = vst [vmem:[%s1200 + $0x1c8] sm:$0xff] %v850
    %1259 = vst [vmem:[%s1200 + $0x1d0] sm:$0xff] %v967
    %1260 = vst [vmem:[%s1200 + $0x1d8] sm:$0xff] %v969
    %1261 = vst [vmem:[%s1200 + $0x1e0] sm:$0xff] %v1086
    %1262 = vst [vmem:[%s1200 + $0x1e8] sm:$0xff] %v1088
    %1263 = vst.msk [vmem:[%s1200 + $0x1f0] sm:$0xff] %vm563, %v1197
    %v1264 = vadd.f32 %v800, %v802
    %v1265 = vadd.f32 %v1264, %v919
    %v1266 = vadd.f32 %v1265, %v921
    %v1267 = vadd.f32 %v1266, %v1038
    %v1268 = vadd.f32 %v1267, %v1040
    %v1269 = vsel %vm563, %v1157, 0.0
    %v1270 = vadd.f32 %v1268, %v1269
    %1271 = vadd.xlane.f32.xlu0 %v1270
    %v1272 = vpop.xlane.xlu0 %1271
    %v1273 = vadd.f32 %v806, %v808
    %v1274 = vadd.f32 %v1273, %v925
    %v1275 = vadd.f32 %v1274, %v927
    %v1276 = vadd.f32 %v1275, %v1044
    %v1277 = vadd.f32 %v1276, %v1046
    %v1278 = vsel %vm563, %v1162, 0.0
    %v1279 = vadd.f32 %v1277, %v1278
    %1280 = vadd.xlane.f32.xlu0 %v1279
    %v1281 = vpop.xlane.xlu0 %1280
    %v1282 = vadd.f32 %v812, %v814
    %v1283 = vadd.f32 %v1282, %v931
    %v1284 = vadd.f32 %v1283, %v933
    %v1285 = vadd.f32 %v1284, %v1050
    %v1286 = vadd.f32 %v1285, %v1052
    %v1287 = vsel %vm563, %v1167, 0.0
    %v1288 = vadd.f32 %v1286, %v1287
    %1289 = vadd.xlane.f32.xlu0 %v1288
    %v1290 = vpop.xlane.xlu0 %1289
    %v1291 = vadd.f32 %v818, %v820
    %v1292 = vadd.f32 %v1291, %v937
    %v1293 = vadd.f32 %v1292, %v939
    %v1294 = vadd.f32 %v1293, %v1056
    %v1295 = vadd.f32 %v1294, %v1058
    %v1296 = vsel %vm563, %v1172, 0.0
    %v1297 = vadd.f32 %v1295, %v1296
    %1298 = vadd.xlane.f32.xlu0 %v1297
    %v1299 = vpop.xlane.xlu0 %1298
    %v1300 = vadd.f32 %v824, %v826
    %v1301 = vadd.f32 %v1300, %v943
    %v1302 = vadd.f32 %v1301, %v945
    %v1303 = vadd.f32 %v1302, %v1062
    %v1304 = vadd.f32 %v1303, %v1064
    %v1305 = vsel %vm563, %v1177, 0.0
    %v1306 = vadd.f32 %v1304, %v1305
    %1307 = vadd.xlane.f32.xlu0 %v1306
    %v1308 = vpop.xlane.xlu0 %1307
    %v1309 = vadd.f32 %v830, %v832
    %v1310 = vadd.f32 %v1309, %v949
    %v1311 = vadd.f32 %v1310, %v951
    %v1312 = vadd.f32 %v1311, %v1068
    %v1313 = vadd.f32 %v1312, %v1070
    %v1314 = vsel %vm563, %v1182, 0.0
    %v1315 = vadd.f32 %v1313, %v1314
    %1316 = vadd.xlane.f32.xlu0 %v1315
    %v1317 = vpop.xlane.xlu0 %1316
    %v1318 = vadd.f32 %v836, %v838
    %v1319 = vadd.f32 %v1318, %v955
    %v1320 = vadd.f32 %v1319, %v957
    %v1321 = vadd.f32 %v1320, %v1074
    %v1322 = vadd.f32 %v1321, %v1076
    %v1323 = vsel %vm563, %v1187, 0.0
    %v1324 = vadd.f32 %v1322, %v1323
    %1325 = vadd.xlane.f32.xlu0 %v1324
    %v1326 = vpop.xlane.xlu0 %1325
    %v1327 = vadd.f32 %v842, %v844
    %v1328 = vadd.f32 %v1327, %v961
    %v1329 = vadd.f32 %v1328, %v963
    %v1330 = vadd.f32 %v1329, %v1080
    %v1331 = vadd.f32 %v1330, %v1082
    %v1332 = vsel %vm563, %v1192, 0.0
    %v1333 = vadd.f32 %v1331, %v1332
    %1334 = vadd.xlane.f32.xlu0 %v1333
    %v1335 = vpop.xlane.xlu0 %1334
    %v1336 = vadd.f32 %v848, %v850
    %v1337 = vadd.f32 %v1336, %v967
    %v1338 = vadd.f32 %v1337, %v969
    %v1339 = vadd.f32 %v1338, %v1086
    %v1340 = vadd.f32 %v1339, %v1088
    %v1341 = vsel %vm563, %v1197, 0.0
    %v1342 = vadd.f32 %v1340, %v1341
    %1343 = vadd.xlane.f32.xlu0 %v1342
    %v1344 = vpop.xlane.xlu0 %1343
    %v1345 = vadd.f32 %v702, %v1272
    %v1346 = vadd.f32 %v703, %v1281
    %v1347 = vadd.f32 %v704, %v1290
    %v1348 = vadd.f32 %v705, %v1299
    %v1349 = vadd.f32 %v706, %v1308
    %v1350 = vadd.f32 %v707, %v1317
    %v1351 = vadd.f32 %v708, %v1326
    %v1352 = vadd.f32 %v709, %v1335
    %v1353 = vadd.f32 %v710, %v1344
    %v1354 = vrcp.pop 1568.0
    %v1355 = vmul.f32 %v1345, %v1354
    %v1356 = vmul.f32 %v1346, %v1354
    %v1357 = vmul.f32 %v1347, %v1354
    %v1358 = vmul.f32 %v1348, %v1354
    %v1359 = vmul.f32 %v1349, %v1354
    %v1360 = vmul.f32 %v1350, %v1354
    %v1361 = vmul.f32 %v1351, %v1354
    %v1362 = vmul.f32 %v1352, %v1354
    %v1363 = vmul.f32 %v1353, %v1354
    %v1364 = vld [vmem:[#allocation5] sm:$0xff]
    %v1365 = vld [vmem:[#allocation5 + $0x8] sm:$0xff]
    %v1366 = vld [vmem:[#allocation5 + $0x10] sm:$0xff]
    %v1367 = vld [vmem:[#allocation5 + $0x18] sm:$0xff]
    %v1368 = vld [vmem:[#allocation5 + $0x20] sm:$0xff]
    %v1369 = vld [vmem:[#allocation5 + $0x28] sm:$0xff]
    %v1370 = vld [vmem:[#allocation5 + $0x30] sm:$0xff]
    %v1371 = vld [vmem:[#allocation5 + $0x38] sm:$0xff]
    %v1372 = vld [vmem:[#allocation5 + $0x40] sm:$0xff]
    %v1373 = vld [vmem:[#allocation5 + $0x48] sm:$0xff]
    %v1374 = vld [vmem:[#allocation5 + $0x50] sm:$0xff]
    %v1375 = vld [vmem:[#allocation5 + $0x58] sm:$0xff]
    %v1376 = vld [vmem:[#allocation5 + $0x60] sm:$0xff]
    %v1377 = vld [vmem:[#allocation5 + $0x68] sm:$0xff]
    %v1378 = vld [vmem:[#allocation5 + $0x70] sm:$0xff]
    %v1379 = vld [vmem:[#allocation5 + $0x78] sm:$0xff]
    %v1380 = vld [vmem:[#allocation5 + $0x80] sm:$0xff]
    %v1381 = vld [vmem:[#allocation5 + $0x88] sm:$0xff]
    %v1382 = vld [vmem:[#allocation5 + $0x90] sm:$0xff]
    %v1383 = vld [vmem:[#allocation5 + $0x98] sm:$0xff]
    %v1384 = vld [vmem:[#allocation5 + $0xa0] sm:$0xff]
    %v1385 = vld [vmem:[#allocation5 + $0xa8] sm:$0xff]
    %v1386 = vld [vmem:[#allocation5 + $0xb0] sm:$0xff]
    %v1387 = vld [vmem:[#allocation5 + $0xb8] sm:$0xff]
    %v1388 = vld [vmem:[#allocation5 + $0xc0] sm:$0xff]
    %v1389 = vld [vmem:[#allocation5 + $0xc8] sm:$0xff]
    %v1390 = vld [vmem:[#allocation5 + $0xd0] sm:$0xff]
    %v1391 = vld [vmem:[#allocation5 + $0xd8] sm:$0xff]
    %v1392 = vld [vmem:[#allocation5 + $0xe0] sm:$0xff]
    %v1393 = vld [vmem:[#allocation5 + $0xe8] sm:$0xff]
    %v1394 = vld [vmem:[#allocation5 + $0xf0] sm:$0xff]
    %v1395 = vld [vmem:[#allocation5 + $0xf8] sm:$0xff]
    %v1396 = vld [vmem:[#allocation5 + $0x100] sm:$0xff]
    %v1397 = vld [vmem:[#allocation5 + $0x108] sm:$0xff]
    %v1398 = vld [vmem:[#allocation5 + $0x110] sm:$0xff]
    %v1399 = vld [vmem:[#allocation5 + $0x118] sm:$0xff]
    %v1400 = vld [vmem:[#allocation5 + $0x120] sm:$0xff]
    %v1401 = vld [vmem:[#allocation5 + $0x128] sm:$0xff]
    %v1402 = vld [vmem:[#allocation5 + $0x130] sm:$0xff]
    %v1403 = vld [vmem:[#allocation5 + $0x138] sm:$0xff]
    %v1404 = vld [vmem:[#allocation5 + $0x140] sm:$0xff]
    %v1405 = vld [vmem:[#allocation5 + $0x148] sm:$0xff]
    %v1406 = vld [vmem:[#allocation5 + $0x150] sm:$0xff]
    %v1407 = vld [vmem:[#allocation5 + $0x158] sm:$0xff]
    %v1408 = vld [vmem:[#allocation5 + $0x160] sm:$0xff]
    %v1409 = vld [vmem:[#allocation5 + $0x168] sm:$0xff]
    %v1410 = vld [vmem:[#allocation5 + $0x170] sm:$0xff]
    %v1411 = vld [vmem:[#allocation5 + $0x178] sm:$0xff]
    %v1412 = vld [vmem:[#allocation5 + $0x180] sm:$0xff]
    %v1413 = vld [vmem:[#allocation5 + $0x188] sm:$0xff]
    %v1414 = vld [vmem:[#allocation5 + $0x190] sm:$0xff]
    %v1415 = vld [vmem:[#allocation5 + $0x198] sm:$0xff]
    %v1416 = vld [vmem:[#allocation5 + $0x1a0] sm:$0xff]
    %v1417 = vld [vmem:[#allocation5 + $0x1a8] sm:$0xff]
    %v1418 = vld [vmem:[#allocation5 + $0x1b0] sm:$0xff]
    %v1419 = vld [vmem:[#allocation5 + $0x1b8] sm:$0xff]
    %v1420 = vld [vmem:[#allocation5 + $0x1c0] sm:$0xff]
    %v1421 = vld [vmem:[#allocation5 + $0x1c8] sm:$0xff]
    %v1422 = vld [vmem:[#allocation5 + $0x1d0] sm:$0xff]
    %v1423 = vld [vmem:[#allocation5 + $0x1d8] sm:$0xff]
    %v1424 = vld [vmem:[#allocation5 + $0x1e0] sm:$0xff]
    %v1425 = vld [vmem:[#allocation5 + $0x1e8] sm:$0xff]
    %v1426 = vld [vmem:[#allocation5 + $0x1f0] sm:$0xff]
    %v1427 = vsub.f32 %v1364, %v1355
    %v1428 = vsub.f32 %v1365, %v1355
    %v1429 = vsub.f32 %v1366, %v1355
    %v1430 = vsub.f32 %v1367, %v1355
    %v1431 = vsub.f32 %v1368, %v1355
    %v1432 = vsub.f32 %v1369, %v1355
    %v1433 = vsub.f32 %v1370, %v1355
    %v1434 = vsub.f32 %v1371, %v1356
    %v1435 = vsub.f32 %v1372, %v1356
    %v1436 = vsub.f32 %v1373, %v1356
    %v1437 = vsub.f32 %v1374, %v1356
    %v1438 = vsub.f32 %v1375, %v1356
    %v1439 = vsub.f32 %v1376, %v1356
    %v1440 = vsub.f32 %v1377, %v1356
    %v1441 = vsub.f32 %v1378, %v1357
    %v1442 = vsub.f32 %v1379, %v1357
    %v1443 = vsub.f32 %v1380, %v1357
    %v1444 = vsub.f32 %v1381, %v1357
    %v1445 = vsub.f32 %v1382, %v1357
    %v1446 = vsub.f32 %v1383, %v1357
    %v1447 = vsub.f32 %v1384, %v1357
    %v1448 = vsub.f32 %v1385, %v1358
    %v1449 = vsub.f32 %v1386, %v1358
    %v1450 = vsub.f32 %v1387, %v1358
    %v1451 = vsub.f32 %v1388, %v1358
    %v1452 = vsub.f32 %v1389, %v1358
    %v1453 = vsub.f32 %v1390, %v1358
    %v1454 = vsub.f32 %v1391, %v1358
    %v1455 = vsub.f32 %v1392, %v1359
    %v1456 = vsub.f32 %v1393, %v1359
    %v1457 = vsub.f32 %v1394, %v1359
    %v1458 = vsub.f32 %v1395, %v1359
    %v1459 = vsub.f32 %v1396, %v1359
    %v1460 = vsub.f32 %v1397, %v1359
    %v1461 = vsub.f32 %v1398, %v1359
    %v1462 = vsub.f32 %v1399, %v1360
    %v1463 = vsub.f32 %v1400, %v1360
    %v1464 = vsub.f32 %v1401, %v1360
    %v1465 = vsub.f32 %v1402, %v1360
    %v1466 = vsub.f32 %v1403, %v1360
    %v1467 = vsub.f32 %v1404, %v1360
    %v1468 = vsub.f32 %v1405, %v1360
    %v1469 = vsub.f32 %v1406, %v1361
    %v1470 = vsub.f32 %v1407, %v1361
    %v1471 = vsub.f32 %v1408, %v1361
    %v1472 = vsub.f32 %v1409, %v1361
    %v1473 = vsub.f32 %v1410, %v1361
    %v1474 = vsub.f32 %v1411, %v1361
    %v1475 = vsub.f32 %v1412, %v1361
    %v1476 = vsub.f32 %v1413, %v1362
    %v1477 = vsub.f32 %v1414, %v1362
    %v1478 = vsub.f32 %v1415, %v1362
    %v1479 = vsub.f32 %v1416, %v1362
    %v1480 = vsub.f32 %v1417, %v1362
    %v1481 = vsub.f32 %v1418, %v1362
    %v1482 = vsub.f32 %v1419, %v1362
    %v1483 = vsub.f32 %v1420, %v1363
    %v1484 = vsub.f32 %v1421, %v1363
    %v1485 = vsub.f32 %v1422, %v1363
    %v1486 = vsub.f32 %v1423, %v1363
    %v1487 = vsub.f32 %v1424, %v1363
    %v1488 = vsub.f32 %v1425, %v1363
    %v1489 = vsub.f32 %v1426, %v1363
    %v1490 = vmul.f32 %v1427, %v1427
    %v1491 = vmul.f32 %v1428, %v1428
    %v1492 = vmul.f32 %v1429, %v1429
    %v1493 = vmul.f32 %v1430, %v1430
    %v1494 = vmul.f32 %v1431, %v1431
    %v1495 = vmul.f32 %v1432, %v1432
    %v1496 = vmul.f32 %v1433, %v1433
    %v1497 = vmul.f32 %v1434, %v1434
    %v1498 = vmul.f32 %v1435, %v1435
    %v1499 = vmul.f32 %v1436, %v1436
    %v1500 = vmul.f32 %v1437, %v1437
    %v1501 = vmul.f32 %v1438, %v1438
    %v1502 = vmul.f32 %v1439, %v1439
    %v1503 = vmul.f32 %v1440, %v1440
    %v1504 = vmul.f32 %v1441, %v1441
    %v1505 = vmul.f32 %v1442, %v1442
    %v1506 = vmul.f32 %v1443, %v1443
    %v1507 = vmul.f32 %v1444, %v1444
    %v1508 = vmul.f32 %v1445, %v1445
    %v1509 = vmul.f32 %v1446, %v1446
    %v1510 = vmul.f32 %v1447, %v1447
    %v1511 = vmul.f32 %v1448, %v1448
    %v1512 = vmul.f32 %v1449, %v1449
    %v1513 = vmul.f32 %v1450, %v1450
    %v1514 = vmul.f32 %v1451, %v1451
    %v1515 = vmul.f32 %v1452, %v1452
    %v1516 = vmul.f32 %v1453, %v1453
    %v1517 = vmul.f32 %v1454, %v1454
    %v1518 = vmul.f32 %v1455, %v1455
    %v1519 = vmul.f32 %v1456, %v1456
    %v1520 = vmul.f32 %v1457, %v1457
    %v1521 = vmul.f32 %v1458, %v1458
    %v1522 = vmul.f32 %v1459, %v1459
    %v1523 = vmul.f32 %v1460, %v1460
    %v1524 = vmul.f32 %v1461, %v1461
    %v1525 = vmul.f32 %v1462, %v1462
    %v1526 = vmul.f32 %v1463, %v1463
    %v1527 = vmul.f32 %v1464, %v1464
    %v1528 = vmul.f32 %v1465, %v1465
    %v1529 = vmul.f32 %v1466, %v1466
    %v1530 = vmul.f32 %v1467, %v1467
    %v1531 = vmul.f32 %v1468, %v1468
    %v1532 = vmul.f32 %v1469, %v1469
    %v1533 = vmul.f32 %v1470, %v1470
    %v1534 = vmul.f32 %v1471, %v1471
    %v1535 = vmul.f32 %v1472, %v1472
    %v1536 = vmul.f32 %v1473, %v1473
    %v1537 = vmul.f32 %v1474, %v1474
    %v1538 = vmul.f32 %v1475, %v1475
    %v1539 = vmul.f32 %v1476, %v1476
    %v1540 = vmul.f32 %v1477, %v1477
    %v1541 = vmul.f32 %v1478, %v1478
    %v1542 = vmul.f32 %v1479, %v1479
    %v1543 = vmul.f32 %v1480, %v1480
    %v1544 = vmul.f32 %v1481, %v1481
    %v1545 = vmul.f32 %v1482, %v1482
    %v1546 = vmul.f32 %v1483, %v1483
    %v1547 = vmul.f32 %v1484, %v1484
    %v1548 = vmul.f32 %v1485, %v1485
    %v1549 = vmul.f32 %v1486, %v1486
    %v1550 = vmul.f32 %v1487, %v1487
    %v1551 = vmul.f32 %v1488, %v1488
    %v1552 = vmul.f32 %v1489, %v1489
    %v1553 = vadd.f32 %v1490, %v1491
    %v1554 = vadd.f32 %v1553, %v1492
    %v1555 = vadd.f32 %v1554, %v1493
    %v1556 = vadd.f32 %v1555, %v1494
    %v1557 = vadd.f32 %v1556, %v1495
    %v1558 = vsel %vm563, %v1496, 0.0
    %v1559 = vadd.f32 %v1557, %v1558
    %1560 = vadd.xlane.f32.xlu0 %v1559
    %v1561 = vpop.xlane.xlu0 %1560
    %v1562 = vadd.f32 %v1497, %v1498
    %v1563 = vadd.f32 %v1562, %v1499
    %v1564 = vadd.f32 %v1563, %v1500
    %v1565 = vadd.f32 %v1564, %v1501
    %v1566 = vadd.f32 %v1565, %v1502
    %v1567 = vsel %vm563, %v1503, 0.0
    %v1568 = vadd.f32 %v1566, %v1567
    %1569 = vadd.xlane.f32.xlu0 %v1568
    %v1570 = vpop.xlane.xlu0 %1569
    %v1571 = vadd.f32 %v1504, %v1505
    %v1572 = vadd.f32 %v1571, %v1506
    %v1573 = vadd.f32 %v1572, %v1507
    %v1574 = vadd.f32 %v1573, %v1508
    %v1575 = vadd.f32 %v1574, %v1509
    %v1576 = vsel %vm563, %v1510, 0.0
    %v1577 = vadd.f32 %v1575, %v1576
    %1578 = vadd.xlane.f32.xlu0 %v1577
    %v1579 = vpop.xlane.xlu0 %1578
    %v1580 = vadd.f32 %v1511, %v1512
    %v1581 = vadd.f32 %v1580, %v1513
    %v1582 = vadd.f32 %v1581, %v1514
    %v1583 = vadd.f32 %v1582, %v1515
    %v1584 = vadd.f32 %v1583, %v1516
    %v1585 = vsel %vm563, %v1517, 0.0
    %v1586 = vadd.f32 %v1584, %v1585
    %1587 = vadd.xlane.f32.xlu0 %v1586
    %v1588 = vpop.xlane.xlu0 %1587
    %v1589 = vadd.f32 %v1518, %v1519
    %v1590 = vadd.f32 %v1589, %v1520
    %v1591 = vadd.f32 %v1590, %v1521
    %v1592 = vadd.f32 %v1591, %v1522
    %v1593 = vadd.f32 %v1592, %v1523
    %v1594 = vsel %vm563, %v1524, 0.0
    %v1595 = vadd.f32 %v1593, %v1594
    %1596 = vadd.xlane.f32.xlu0 %v1595
    %v1597 = vpop.xlane.xlu0 %1596
    %v1598 = vadd.f32 %v1525, %v1526
    %v1599 = vadd.f32 %v1598, %v1527
    %v1600 = vadd.f32 %v1599, %v1528
    %v1601 = vadd.f32 %v1600, %v1529
    %v1602 = vadd.f32 %v1601, %v1530
    %v1603 = vsel %vm563, %v1531, 0.0
    %v1604 = vadd.f32 %v1602, %v1603
    %1605 = vadd.xlane.f32.xlu0 %v1604
    %v1606 = vpop.xlane.xlu0 %1605
    %v1607 = vadd.f32 %v1532, %v1533
    %v1608 = vadd.f32 %v1607, %v1534
    %v1609 = vadd.f32 %v1608, %v1535
    %v1610 = vadd.f32 %v1609, %v1536
    %v1611 = vadd.f32 %v1610, %v1537
    %v1612 = vsel %vm563, %v1538, 0.0
    %v1613 = vadd.f32 %v1611, %v1612
    %1614 = vadd.xlane.f32.xlu0 %v1613
    %v1615 = vpop.xlane.xlu0 %1614
    %v1616 = vadd.f32 %v1539, %v1540
    %v1617 = vadd.f32 %v1616, %v1541
    %v1618 = vadd.f32 %v1617, %v1542
    %v1619 = vadd.f32 %v1618, %v1543
    %v1620 = vadd.f32 %v1619, %v1544
    %v1621 = vsel %vm563, %v1545, 0.0
    %v1622 = vadd.f32 %v1620, %v1621
    %1623 = vadd.xlane.f32.xlu0 %v1622
    %v1624 = vpop.xlane.xlu0 %1623
    %v1625 = vadd.f32 %v1546, %v1547
    %v1626 = vadd.f32 %v1625, %v1548
    %v1627 = vadd.f32 %v1626, %v1549
    %v1628 = vadd.f32 %v1627, %v1550
    %v1629 = vadd.f32 %v1628, %v1551
    %v1630 = vsel %vm563, %v1552, 0.0
    %v1631 = vadd.f32 %v1629, %v1630
    %1632 = vadd.xlane.f32.xlu0 %v1631
    %v1633 = vpop.xlane.xlu0 %1632
    %v1634 = vadd.f32 %v1561, 0.0
    %v1635 = vadd.f32 %v1570, 0.0
    %v1636 = vadd.f32 %v1579, 0.0
    %v1637 = vadd.f32 %v1588, 0.0
    %v1638 = vadd.f32 %v1597, 0.0
    %v1639 = vadd.f32 %v1606, 0.0
    %v1640 = vadd.f32 %v1615, 0.0
    %v1641 = vadd.f32 %v1624, 0.0
    %v1642 = vadd.f32 %v1633, 0.0
    %v1643 = vld [vmem:[%s1200] sm:$0xff]
    %v1644 = vld [vmem:[%s1200 + $0x8] sm:$0xff]
    %v1645 = vld [vmem:[%s1200 + $0x10] sm:$0xff]
    %v1646 = vld [vmem:[%s1200 + $0x18] sm:$0xff]
    %v1647 = vld [vmem:[%s1200 + $0x20] sm:$0xff]
    %v1648 = vld [vmem:[%s1200 + $0x28] sm:$0xff]
    %v1649 = vld [vmem:[%s1200 + $0x30] sm:$0xff]
    %v1650 = vld [vmem:[%s1200 + $0x38] sm:$0xff]
    %v1651 = vld [vmem:[%s1200 + $0x40] sm:$0xff]
    %v1652 = vld [vmem:[%s1200 + $0x48] sm:$0xff]
    %v1653 = vld [vmem:[%s1200 + $0x50] sm:$0xff]
    %v1654 = vld [vmem:[%s1200 + $0x58] sm:$0xff]
    %v1655 = vld [vmem:[%s1200 + $0x60] sm:$0xff]
    %v1656 = vld [vmem:[%s1200 + $0x68] sm:$0xff]
    %v1657 = vld [vmem:[%s1200 + $0x70] sm:$0xff]
    %v1658 = vld [vmem:[%s1200 + $0x78] sm:$0xff]
    %v1659 = vld [vmem:[%s1200 + $0x80] sm:$0xff]
    %v1660 = vld [vmem:[%s1200 + $0x88] sm:$0xff]
    %v1661 = vld [vmem:[%s1200 + $0x90] sm:$0xff]
    %v1662 = vld [vmem:[%s1200 + $0x98] sm:$0xff]
    %v1663 = vld [vmem:[%s1200 + $0xa0] sm:$0xff]
    %v1664 = vld [vmem:[%s1200 + $0xa8] sm:$0xff]
    %v1665 = vld [vmem:[%s1200 + $0xb0] sm:$0xff]
    %v1666 = vld [vmem:[%s1200 + $0xb8] sm:$0xff]
    %v1667 = vld [vmem:[%s1200 + $0xc0] sm:$0xff]
    %v1668 = vld [vmem:[%s1200 + $0xc8] sm:$0xff]
    %v1669 = vld [vmem:[%s1200 + $0xd0] sm:$0xff]
    %v1670 = vld [vmem:[%s1200 + $0xd8] sm:$0xff]
    %v1671 = vld [vmem:[%s1200 + $0xe0] sm:$0xff]
    %v1672 = vld [vmem:[%s1200 + $0xe8] sm:$0xff]
    %v1673 = vld [vmem:[%s1200 + $0xf0] sm:$0xff]
    %v1674 = vld [vmem:[%s1200 + $0xf8] sm:$0xff]
    %v1675 = vld [vmem:[%s1200 + $0x100] sm:$0xff]
    %v1676 = vld [vmem:[%s1200 + $0x108] sm:$0xff]
    %v1677 = vld [vmem:[%s1200 + $0x110] sm:$0xff]
    %v1678 = vld [vmem:[%s1200 + $0x118] sm:$0xff]
    %v1679 = vld [vmem:[%s1200 + $0x120] sm:$0xff]
    %v1680 = vld [vmem:[%s1200 + $0x128] sm:$0xff]
    %v1681 = vld [vmem:[%s1200 + $0x130] sm:$0xff]
    %v1682 = vld [vmem:[%s1200 + $0x138] sm:$0xff]
    %v1683 = vld [vmem:[%s1200 + $0x140] sm:$0xff]
    %v1684 = vld [vmem:[%s1200 + $0x148] sm:$0xff]
    %v1685 = vld [vmem:[%s1200 + $0x150] sm:$0xff]
    %v1686 = vld [vmem:[%s1200 + $0x158] sm:$0xff]
    %v1687 = vld [vmem:[%s1200 + $0x160] sm:$0xff]
    %v1688 = vld [vmem:[%s1200 + $0x168] sm:$0xff]
    %v1689 = vld [vmem:[%s1200 + $0x170] sm:$0xff]
    %v1690 = vld [vmem:[%s1200 + $0x178] sm:$0xff]
    %v1691 = vld [vmem:[%s1200 + $0x180] sm:$0xff]
    %v1692 = vld [vmem:[%s1200 + $0x188] sm:$0xff]
    %v1693 = vld [vmem:[%s1200 + $0x190] sm:$0xff]
    %v1694 = vld [vmem:[%s1200 + $0x198] sm:$0xff]
    %v1695 = vld [vmem:[%s1200 + $0x1a0] sm:$0xff]
    %v1696 = vld [vmem:[%s1200 + $0x1a8] sm:$0xff]
    %v1697 = vld [vmem:[%s1200 + $0x1b0] sm:$0xff]
    %v1698 = vld [vmem:[%s1200 + $0x1b8] sm:$0xff]
    %v1699 = vld [vmem:[%s1200 + $0x1c0] sm:$0xff]
    %v1700 = vld [vmem:[%s1200 + $0x1c8] sm:$0xff]
    %v1701 = vld [vmem:[%s1200 + $0x1d0] sm:$0xff]
    %v1702 = vld [vmem:[%s1200 + $0x1d8] sm:$0xff]
    %v1703 = vld [vmem:[%s1200 + $0x1e0] sm:$0xff]
    %v1704 = vld [vmem:[%s1200 + $0x1e8] sm:$0xff]
    %v1705 = vld [vmem:[%s1200 + $0x1f0] sm:$0xff]
    %v1706 = vsub.f32 %v1643, %v1355
    %v1707 = vsub.f32 %v1644, %v1355
    %v1708 = vsub.f32 %v1645, %v1355
    %v1709 = vsub.f32 %v1646, %v1355
    %v1710 = vsub.f32 %v1647, %v1355
    %v1711 = vsub.f32 %v1648, %v1355
    %v1712 = vsub.f32 %v1649, %v1355
    %v1713 = vsub.f32 %v1650, %v1356
    %v1714 = vsub.f32 %v1651, %v1356
    %v1715 = vsub.f32 %v1652, %v1356
    %v1716 = vsub.f32 %v1653, %v1356
    %v1717 = vsub.f32 %v1654, %v1356
    %v1718 = vsub.f32 %v1655, %v1356
    %v1719 = vsub.f32 %v1656, %v1356
    %v1720 = vsub.f32 %v1657, %v1357
    %v1721 = vsub.f32 %v1658, %v1357
    %v1722 = vsub.f32 %v1659, %v1357
    %v1723 = vsub.f32 %v1660, %v1357
    %v1724 = vsub.f32 %v1661, %v1357
    %v1725 = vsub.f32 %v1662, %v1357
    %v1726 = vsub.f32 %v1663, %v1357
    %v1727 = vsub.f32 %v1664, %v1358
    %v1728 = vsub.f32 %v1665, %v1358
    %v1729 = vsub.f32 %v1666, %v1358
    %v1730 = vsub.f32 %v1667, %v1358
    %v1731 = vsub.f32 %v1668, %v1358
    %v1732 = vsub.f32 %v1669, %v1358
    %v1733 = vsub.f32 %v1670, %v1358
    %v1734 = vsub.f32 %v1671, %v1359
    %v1735 = vsub.f32 %v1672, %v1359
    %v1736 = vsub.f32 %v1673, %v1359
    %v1737 = vsub.f32 %v1674, %v1359
    %v1738 = vsub.f32 %v1675, %v1359
    %v1739 = vsub.f32 %v1676, %v1359
    %v1740 = vsub.f32 %v1677, %v1359
    %v1741 = vsub.f32 %v1678, %v1360
    %v1742 = vsub.f32 %v1679, %v1360
    %v1743 = vsub.f32 %v1680, %v1360
    %v1744 = vsub.f32 %v1681, %v1360
    %v1745 = vsub.f32 %v1682, %v1360
    %v1746 = vsub.f32 %v1683, %v1360
    %v1747 = vsub.f32 %v1684, %v1360
    %v1748 = vsub.f32 %v1685, %v1361
    %v1749 = vsub.f32 %v1686, %v1361
    %v1750 = vsub.f32 %v1687, %v1361
    %v1751 = vsub.f32 %v1688, %v1361
    %v1752 = vsub.f32 %v1689, %v1361
    %v1753 = vsub.f32 %v1690, %v1361
    %v1754 = vsub.f32 %v1691, %v1361
    %v1755 = vsub.f32 %v1692, %v1362
    %v1756 = vsub.f32 %v1693, %v1362
    %v1757 = vsub.f32 %v1694, %v1362
    %v1758 = vsub.f32 %v1695, %v1362
    %v1759 = vsub.f32 %v1696, %v1362
    %v1760 = vsub.f32 %v1697, %v1362
    %v1761 = vsub.f32 %v1698, %v1362
    %v1762 = vsub.f32 %v1699, %v1363
    %v1763 = vsub.f32 %v1700, %v1363
    %v1764 = vsub.f32 %v1701, %v1363
    %v1765 = vsub.f32 %v1702, %v1363
    %v1766 = vsub.f32 %v1703, %v1363
    %v1767 = vsub.f32 %v1704, %v1363
    %v1768 = vsub.f32 %v1705, %v1363
    %v1769 = vmul.f32 %v1706, %v1706
    %v1770 = vmul.f32 %v1707, %v1707
    %v1771 = vmul.f32 %v1708, %v1708
    %v1772 = vmul.f32 %v1709, %v1709
    %v1773 = vmul.f32 %v1710, %v1710
    %v1774 = vmul.f32 %v1711, %v1711
    %v1775 = vmul.f32 %v1712, %v1712
    %v1776 = vmul.f32 %v1713, %v1713
    %v1777 = vmul.f32 %v1714, %v1714
    %v1778 = vmul.f32 %v1715, %v1715
    %v1779 = vmul.f32 %v1716, %v1716
    %v1780 = vmul.f32 %v1717, %v1717
    %v1781 = vmul.f32 %v1718, %v1718
    %v1782 = vmul.f32 %v1719, %v1719
    %v1783 = vmul.f32 %v1720, %v1720
    %v1784 = vmul.f32 %v1721, %v1721
    %v1785 = vmul.f32 %v1722, %v1722
    %v1786 = vmul.f32 %v1723, %v1723
    %v1787 = vmul.f32 %v1724, %v1724
    %v1788 = vmul.f32 %v1725, %v1725
    %v1789 = vmul.f32 %v1726, %v1726
    %v1790 = vmul.f32 %v1727, %v1727
    %v1791 = vmul.f32 %v1728, %v1728
    %v1792 = vmul.f32 %v1729, %v1729
    %v1793 = vmul.f32 %v1730, %v1730
    %v1794 = vmul.f32 %v1731, %v1731
    %v1795 = vmul.f32 %v1732, %v1732
    %v1796 = vmul.f32 %v1733, %v1733
    %v1797 = vmul.f32 %v1734, %v1734
    %v1798 = vmul.f32 %v1735, %v1735
    %v1799 = vmul.f32 %v1736, %v1736
    %v1800 = vmul.f32 %v1737, %v1737
    %v1801 = vmul.f32 %v1738, %v1738
    %v1802 = vmul.f32 %v1739, %v1739
    %v1803 = vmul.f32 %v1740, %v1740
    %v1804 = vmul.f32 %v1741, %v1741
    %v1805 = vmul.f32 %v1742, %v1742
    %v1806 = vmul.f32 %v1743, %v1743
    %v1807 = vmul.f32 %v1744, %v1744
    %v1808 = vmul.f32 %v1745, %v1745
    %v1809 = vmul.f32 %v1746, %v1746
    %v1810 = vmul.f32 %v1747, %v1747
    %v1811 = vmul.f32 %v1748, %v1748
    %v1812 = vmul.f32 %v1749, %v1749
    %v1813 = vmul.f32 %v1750, %v1750
    %v1814 = vmul.f32 %v1751, %v1751
    %v1815 = vmul.f32 %v1752, %v1752
    %v1816 = vmul.f32 %v1753, %v1753
    %v1817 = vmul.f32 %v1754, %v1754
    %v1818 = vmul.f32 %v1755, %v1755
    %v1819 = vmul.f32 %v1756, %v1756
    %v1820 = vmul.f32 %v1757, %v1757
    %v1821 = vmul.f32 %v1758, %v1758
    %v1822 = vmul.f32 %v1759, %v1759
    %v1823 = vmul.f32 %v1760, %v1760
    %v1824 = vmul.f32 %v1761, %v1761
    %v1825 = vmul.f32 %v1762, %v1762
    %v1826 = vmul.f32 %v1763, %v1763
    %v1827 = vmul.f32 %v1764, %v1764
    %v1828 = vmul.f32 %v1765, %v1765
    %v1829 = vmul.f32 %v1766, %v1766
    %v1830 = vmul.f32 %v1767, %v1767
    %v1831 = vmul.f32 %v1768, %v1768
    %v1832 = vadd.f32 %v1769, %v1770
    %v1833 = vadd.f32 %v1832, %v1771
    %v1834 = vadd.f32 %v1833, %v1772
    %v1835 = vadd.f32 %v1834, %v1773
    %v1836 = vadd.f32 %v1835, %v1774
    %v1837 = vsel %vm563, %v1775, 0.0
    %v1838 = vadd.f32 %v1836, %v1837
    %1839 = vadd.xlane.f32.xlu0 %v1838
    %v1840 = vpop.xlane.xlu0 %1839
    %v1841 = vadd.f32 %v1776, %v1777
    %v1842 = vadd.f32 %v1841, %v1778
    %v1843 = vadd.f32 %v1842, %v1779
    %v1844 = vadd.f32 %v1843, %v1780
    %v1845 = vadd.f32 %v1844, %v1781
    %v1846 = vsel %vm563, %v1782, 0.0
    %v1847 = vadd.f32 %v1845, %v1846
    %1848 = vadd.xlane.f32.xlu0 %v1847
    %v1849 = vpop.xlane.xlu0 %1848
    %v1850 = vadd.f32 %v1783, %v1784
    %v1851 = vadd.f32 %v1850, %v1785
    %v1852 = vadd.f32 %v1851, %v1786
    %v1853 = vadd.f32 %v1852, %v1787
    %v1854 = vadd.f32 %v1853, %v1788
    %v1855 = vsel %vm563, %v1789, 0.0
    %v1856 = vadd.f32 %v1854, %v1855
    %1857 = vadd.xlane.f32.xlu0 %v1856
    %v1858 = vpop.xlane.xlu0 %1857
    %v1859 = vadd.f32 %v1790, %v1791
    %v1860 = vadd.f32 %v1859, %v1792
    %v1861 = vadd.f32 %v1860, %v1793
    %v1862 = vadd.f32 %v1861, %v1794
    %v1863 = vadd.f32 %v1862, %v1795
    %v1864 = vsel %vm563, %v1796, 0.0
    %v1865 = vadd.f32 %v1863, %v1864
    %1866 = vadd.xlane.f32.xlu0 %v1865
    %v1867 = vpop.xlane.xlu0 %1866
    %v1868 = vadd.f32 %v1797, %v1798
    %v1869 = vadd.f32 %v1868, %v1799
    %v1870 = vadd.f32 %v1869, %v1800
    %v1871 = vadd.f32 %v1870, %v1801
    %v1872 = vadd.f32 %v1871, %v1802
    %v1873 = vsel %vm563, %v1803, 0.0
    %v1874 = vadd.f32 %v1872, %v1873
    %1875 = vadd.xlane.f32.xlu0 %v1874
    %v1876 = vpop.xlane.xlu0 %1875
    %v1877 = vadd.f32 %v1804, %v1805
    %v1878 = vadd.f32 %v1877, %v1806
    %v1879 = vadd.f32 %v1878, %v1807
    %v1880 = vadd.f32 %v1879, %v1808
    %v1881 = vadd.f32 %v1880, %v1809
    %v1882 = vsel %vm563, %v1810, 0.0
    %v1883 = vadd.f32 %v1881, %v1882
    %1884 = vadd.xlane.f32.xlu0 %v1883
    %v1885 = vpop.xlane.xlu0 %1884
    %v1886 = vadd.f32 %v1811, %v1812
    %v1887 = vadd.f32 %v1886, %v1813
    %v1888 = vadd.f32 %v1887, %v1814
    %v1889 = vadd.f32 %v1888, %v1815
    %v1890 = vadd.f32 %v1889, %v1816
    %v1891 = vsel %vm563, %v1817, 0.0
    %v1892 = vadd.f32 %v1890, %v1891
    %1893 = vadd.xlane.f32.xlu0 %v1892
    %v1894 = vpop.xlane.xlu0 %1893
    %v1895 = vadd.f32 %v1818, %v1819
    %v1896 = vadd.f32 %v1895, %v1820
    %v1897 = vadd.f32 %v1896, %v1821
    %v1898 = vadd.f32 %v1897, %v1822
    %v1899 = vadd.f32 %v1898, %v1823
    %v1900 = vsel %vm563, %v1824, 0.0
    %v1901 = vadd.f32 %v1899, %v1900
    %1902 = vadd.xlane.f32.xlu0 %v1901
    %v1903 = vpop.xlane.xlu0 %1902
    %v1904 = vadd.f32 %v1825, %v1826
    %v1905 = vadd.f32 %v1904, %v1827
    %v1906 = vadd.f32 %v1905, %v1828
    %v1907 = vadd.f32 %v1906, %v1829
    %v1908 = vadd.f32 %v1907, %v1830
    %v1909 = vsel %vm563, %v1831, 0.0
    %v1910 = vadd.f32 %v1908, %v1909
    %1911 = vadd.xlane.f32.xlu0 %v1910
    %v1912 = vpop.xlane.xlu0 %1911
    %v1913 = vadd.f32 %v1634, %v1840
    %v1914 = vadd.f32 %v1635, %v1849
    %v1915 = vadd.f32 %v1636, %v1858
    %v1916 = vadd.f32 %v1637, %v1867
    %v1917 = vadd.f32 %v1638, %v1876
    %v1918 = vadd.f32 %v1639, %v1885
    %v1919 = vadd.f32 %v1640, %v1894
    %v1920 = vadd.f32 %v1641, %v1903
    %v1921 = vadd.f32 %v1642, %v1912
    %v1922 = vmul.f32 %v1913, %v1354
    %v1923 = vmul.f32 %v1914, %v1354
    %v1924 = vmul.f32 %v1915, %v1354
    %v1925 = vmul.f32 %v1916, %v1354
    %v1926 = vmul.f32 %v1917, %v1354
    %v1927 = vmul.f32 %v1918, %v1354
    %v1928 = vmul.f32 %v1919, %v1354
    %v1929 = vmul.f32 %v1920, %v1354
    %v1930 = vmul.f32 %v1921, %v1354
    %v1931 = vadd.f32 %v1922, 1e-05
    %v1932 = vadd.f32 %v1923, 1e-05
    %v1933 = vadd.f32 %v1924, 1e-05
    %v1934 = vadd.f32 %v1925, 1e-05
    %v1935 = vadd.f32 %v1926, 1e-05
    %v1936 = vadd.f32 %v1927, 1e-05
    %v1937 = vadd.f32 %v1928, 1e-05
    %v1938 = vadd.f32 %v1929, 1e-05
    %v1939 = vadd.f32 %v1930, 1e-05
    %v1940 = vrsqrt.pop %v1931
    %v1941 = vrsqrt.pop %v1932
    %v1942 = vrsqrt.pop %v1933
    %v1943 = vrsqrt.pop %v1934
    %v1944 = vrsqrt.pop %v1935
    %v1945 = vrsqrt.pop %v1936
    %v1946 = vrsqrt.pop %v1937
    %v1947 = vrsqrt.pop %v1938
    %v1948 = vrsqrt.pop %v1939
    %v1949 = vld [vmem:[%s2] sm:$0xff]
    %v1950 = vld [vmem:[%s2 + $0x8] sm:$0xff]
    %v1951 = vld [vmem:[%s2 + $0x10] sm:$0xff]
    %v1952 = vld [vmem:[%s2 + $0x18] sm:$0xff]
    %v1953 = vld [vmem:[%s2 + $0x20] sm:$0xff]
    %v1954 = vld [vmem:[%s2 + $0x28] sm:$0xff]
    %v1955 = vld [vmem:[%s2 + $0x30] sm:$0xff]
    %v1956 = vld [vmem:[%s2 + $0x38] sm:$0xff]
    %v1957 = vld [vmem:[%s2 + $0x40] sm:$0xff]
    %v1958 = vmul.f32 %v1949, %v1940
    %v1959 = vmul.f32 %v1950, %v1941
    %v1960 = vmul.f32 %v1951, %v1942
    %v1961 = vmul.f32 %v1952, %v1943
    %v1962 = vmul.f32 %v1953, %v1944
    %v1963 = vmul.f32 %v1954, %v1945
    %v1964 = vmul.f32 %v1955, %v1946
    %v1965 = vmul.f32 %v1956, %v1947
    %v1966 = vmul.f32 %v1957, %v1948
    %v1967 = vld [vmem:[%s3] sm:$0xff]
    %v1968 = vld [vmem:[%s3 + $0x8] sm:$0xff]
    %v1969 = vld [vmem:[%s3 + $0x10] sm:$0xff]
    %v1970 = vld [vmem:[%s3 + $0x18] sm:$0xff]
    %v1971 = vld [vmem:[%s3 + $0x20] sm:$0xff]
    %v1972 = vld [vmem:[%s3 + $0x28] sm:$0xff]
    %v1973 = vld [vmem:[%s3 + $0x30] sm:$0xff]
    %v1974 = vld [vmem:[%s3 + $0x38] sm:$0xff]
    %v1975 = vld [vmem:[%s3 + $0x40] sm:$0xff]
    %v1976 = vmul.f32 %v1355, %v1958
    %v1977 = vmul.f32 %v1356, %v1959
    %v1978 = vmul.f32 %v1357, %v1960
    %v1979 = vmul.f32 %v1358, %v1961
    %v1980 = vmul.f32 %v1359, %v1962
    %v1981 = vmul.f32 %v1360, %v1963
    %v1982 = vmul.f32 %v1361, %v1964
    %v1983 = vmul.f32 %v1362, %v1965
    %v1984 = vmul.f32 %v1363, %v1966
    %v1985 = vsub.f32 %v1967, %v1976
    %v1986 = vsub.f32 %v1968, %v1977
    %v1987 = vsub.f32 %v1969, %v1978
    %v1988 = vsub.f32 %v1970, %v1979
    %v1989 = vsub.f32 %v1971, %v1980
    %v1990 = vsub.f32 %v1972, %v1981
    %v1991 = vsub.f32 %v1973, %v1982
    %v1992 = vsub.f32 %v1974, %v1983
    %v1993 = vsub.f32 %v1975, %v1984
    %1995 = vset.pattern.permute.xlu0 0
    %1996 = vperm.xlu0 %1995, %v1958
    %v1997 = vpop.permute.xlu0 %1996
    %2000 = vset.pattern.permute.xlu0 0
    %2001 = vperm.xlu0 %2000, %v1959
    %v2002 = vpop.permute.xlu0 %2001
    %2005 = vset.pattern.permute.xlu0 0
    %2006 = vperm.xlu0 %2005, %v1960
    %v2007 = vpop.permute.xlu0 %2006
    %2010 = vset.pattern.permute.xlu0 0
    %2011 = vperm.xlu0 %2010, %v1961
    %v2012 = vpop.permute.xlu0 %2011
    %2015 = vset.pattern.permute.xlu0 0
    %2016 = vperm.xlu0 %2015, %v1962
    %v2017 = vpop.permute.xlu0 %2016
    %2020 = vset.pattern.permute.xlu0 0
    %2021 = vperm.xlu0 %2020, %v1963
    %v2022 = vpop.permute.xlu0 %2021
    %2025 = vset.pattern.permute.xlu0 0
    %2026 = vperm.xlu0 %2025, %v1964
    %v2027 = vpop.permute.xlu0 %2026
    %2030 = vset.pattern.permute.xlu0 0
    %2031 = vperm.xlu0 %2030, %v1965
    %v2032 = vpop.permute.xlu0 %2031
    %2035 = vset.pattern.permute.xlu0 0
    %2036 = vperm.xlu0 %2035, %v1966
    %v2037 = vpop.permute.xlu0 %2036
    %v2039 = vmul.f32 %v1364, %v1997
    %v2040 = vmul.f32 %v1365, %v1997
    %v2041 = vmul.f32 %v1366, %v1997
    %v2042 = vmul.f32 %v1367, %v1997
    %v2043 = vmul.f32 %v1368, %v1997
    %v2044 = vmul.f32 %v1369, %v1997
    %v2045 = vmul.f32 %v1370, %v1997
    %v2046 = vmul.f32 %v1371, %v2002
    %v2047 = vmul.f32 %v1372, %v2002
    %v2048 = vmul.f32 %v1373, %v2002
    %v2049 = vmul.f32 %v1374, %v2002
    %v2050 = vmul.f32 %v1375, %v2002
    %v2051 = vmul.f32 %v1376, %v2002
    %v2052 = vmul.f32 %v1377, %v2002
    %v2053 = vmul.f32 %v1378, %v2007
    %v2054 = vmul.f32 %v1379, %v2007
    %v2055 = vmul.f32 %v1380, %v2007
    %v2056 = vmul.f32 %v1381, %v2007
    %v2057 = vmul.f32 %v1382, %v2007
    %v2058 = vmul.f32 %v1383, %v2007
    %v2059 = vmul.f32 %v1384, %v2007
    %v2060 = vmul.f32 %v1385, %v2012
    %v2061 = vmul.f32 %v1386, %v2012
    %v2062 = vmul.f32 %v1387, %v2012
    %v2063 = vmul.f32 %v1388, %v2012
    %v2064 = vmul.f32 %v1389, %v2012
    %v2065 = vmul.f32 %v1390, %v2012
    %v2066 = vmul.f32 %v1391, %v2012
    %v2067 = vmul.f32 %v1392, %v2017
    %v2068 = vmul.f32 %v1393, %v2017
    %v2069 = vmul.f32 %v1394, %v2017
    %v2070 = vmul.f32 %v1395, %v2017
    %v2071 = vmul.f32 %v1396, %v2017
    %v2072 = vmul.f32 %v1397, %v2017
    %v2073 = vmul.f32 %v1398, %v2017
    %v2074 = vmul.f32 %v1399, %v2022
    %v2075 = vmul.f32 %v1400, %v2022
    %v2076 = vmul.f32 %v1401, %v2022
    %v2077 = vmul.f32 %v1402, %v2022
    %v2078 = vmul.f32 %v1403, %v2022
    %v2079 = vmul.f32 %v1404, %v2022
    %v2080 = vmul.f32 %v1405, %v2022
    %v2081 = vmul.f32 %v1406, %v2027
    %v2082 = vmul.f32 %v1407, %v2027
    %v2083 = vmul.f32 %v1408, %v2027
    %v2084 = vmul.f32 %v1409, %v2027
    %v2085 = vmul.f32 %v1410, %v2027
    %v2086 = vmul.f32 %v1411, %v2027
    %v2087 = vmul.f32 %v1412, %v2027
    %v2088 = vmul.f32 %v1413, %v2032
    %v2089 = vmul.f32 %v1414, %v2032
    %v2090 = vmul.f32 %v1415, %v2032
    %v2091 = vmul.f32 %v1416, %v2032
    %v2092 = vmul.f32 %v1417, %v2032
    %v2093 = vmul.f32 %v1418, %v2032
    %v2094 = vmul.f32 %v1419, %v2032
    %v2095 = vmul.f32 %v1420, %v2037
    %v2096 = vmul.f32 %v1421, %v2037
    %v2097 = vmul.f32 %v1422, %v2037
    %v2098 = vmul.f32 %v1423, %v2037
    %v2099 = vmul.f32 %v1424, %v2037
    %v2100 = vmul.f32 %v1425, %v2037
    %v2101 = vmul.f32 %v1426, %v2037
    %2103 = vset.pattern.permute.xlu0 0
    %2104 = vperm.xlu0 %2103, %v1985
    %v2105 = vpop.permute.xlu0 %2104
    %2108 = vset.pattern.permute.xlu0 0
    %2109 = vperm.xlu0 %2108, %v1986
    %v2110 = vpop.permute.xlu0 %2109
    %2113 = vset.pattern.permute.xlu0 0
    %2114 = vperm.xlu0 %2113, %v1987
    %v2115 = vpop.permute.xlu0 %2114
    %2118 = vset.pattern.permute.xlu0 0
    %2119 = vperm.xlu0 %2118, %v1988
    %v2120 = vpop.permute.xlu0 %2119
    %2123 = vset.pattern.permute.xlu0 0
    %2124 = vperm.xlu0 %2123, %v1989
    %v2125 = vpop.permute.xlu0 %2124
    %2128 = vset.pattern.permute.xlu0 0
    %2129 = vperm.xlu0 %2128, %v1990
    %v2130 = vpop.permute.xlu0 %2129
    %2133 = vset.pattern.permute.xlu0 0
    %2134 = vperm.xlu0 %2133, %v1991
    %v2135 = vpop.permute.xlu0 %2134
    %2138 = vset.pattern.permute.xlu0 0
    %2139 = vperm.xlu0 %2138, %v1992
    %v2140 = vpop.permute.xlu0 %2139
    %2143 = vset.pattern.permute.xlu0 0
    %2144 = vperm.xlu0 %2143, %v1993
    %v2145 = vpop.permute.xlu0 %2144
    %v2147 = vadd.f32 %v2039, %v2105
    %v2148 = vadd.f32 %v2040, %v2105
    %v2149 = vadd.f32 %v2041, %v2105
    %v2150 = vadd.f32 %v2042, %v2105
    %v2151 = vadd.f32 %v2043, %v2105
    %v2152 = vadd.f32 %v2044, %v2105
    %v2153 = vadd.f32 %v2045, %v2105
    %v2154 = vadd.f32 %v2046, %v2110
    %v2155 = vadd.f32 %v2047, %v2110
    %v2156 = vadd.f32 %v2048, %v2110
    %v2157 = vadd.f32 %v2049, %v2110
    %v2158 = vadd.f32 %v2050, %v2110
    %v2159 = vadd.f32 %v2051, %v2110
    %v2160 = vadd.f32 %v2052, %v2110
    %v2161 = vadd.f32 %v2053, %v2115
    %v2162 = vadd.f32 %v2054, %v2115
    %v2163 = vadd.f32 %v2055, %v2115
    %v2164 = vadd.f32 %v2056, %v2115
    %v2165 = vadd.f32 %v2057, %v2115
    %v2166 = vadd.f32 %v2058, %v2115
    %v2167 = vadd.f32 %v2059, %v2115
    %v2168 = vadd.f32 %v2060, %v2120
    %v2169 = vadd.f32 %v2061, %v2120
    %v2170 = vadd.f32 %v2062, %v2120
    %v2171 = vadd.f32 %v2063, %v2120
    %v2172 = vadd.f32 %v2064, %v2120
    %v2173 = vadd.f32 %v2065, %v2120
    %v2174 = vadd.f32 %v2066, %v2120
    %v2175 = vadd.f32 %v2067, %v2125
    %v2176 = vadd.f32 %v2068, %v2125
    %v2177 = vadd.f32 %v2069, %v2125
    %v2178 = vadd.f32 %v2070, %v2125
    %v2179 = vadd.f32 %v2071, %v2125
    %v2180 = vadd.f32 %v2072, %v2125
    %v2181 = vadd.f32 %v2073, %v2125
    %v2182 = vadd.f32 %v2074, %v2130
    %v2183 = vadd.f32 %v2075, %v2130
    %v2184 = vadd.f32 %v2076, %v2130
    %v2185 = vadd.f32 %v2077, %v2130
    %v2186 = vadd.f32 %v2078, %v2130
    %v2187 = vadd.f32 %v2079, %v2130
    %v2188 = vadd.f32 %v2080, %v2130
    %v2189 = vadd.f32 %v2081, %v2135
    %v2190 = vadd.f32 %v2082, %v2135
    %v2191 = vadd.f32 %v2083, %v2135
    %v2192 = vadd.f32 %v2084, %v2135
    %v2193 = vadd.f32 %v2085, %v2135
    %v2194 = vadd.f32 %v2086, %v2135
    %v2195 = vadd.f32 %v2087, %v2135
    %v2196 = vadd.f32 %v2088, %v2140
    %v2197 = vadd.f32 %v2089, %v2140
    %v2198 = vadd.f32 %v2090, %v2140
    %v2199 = vadd.f32 %v2091, %v2140
    %v2200 = vadd.f32 %v2092, %v2140
    %v2201 = vadd.f32 %v2093, %v2140
    %v2202 = vadd.f32 %v2094, %v2140
    %v2203 = vadd.f32 %v2095, %v2145
    %v2204 = vadd.f32 %v2096, %v2145
    %v2205 = vadd.f32 %v2097, %v2145
    %v2206 = vadd.f32 %v2098, %v2145
    %v2207 = vadd.f32 %v2099, %v2145
    %v2208 = vadd.f32 %v2100, %v2145
    %v2209 = vadd.f32 %v2101, %v2145
    %2210 = vst [vmem:[#allocation5] sm:$0xff] %v2147
    %2211 = vst [vmem:[#allocation5 + $0x8] sm:$0xff] %v2148
    %2212 = vst [vmem:[#allocation5 + $0x10] sm:$0xff] %v2149
    %2213 = vst [vmem:[#allocation5 + $0x18] sm:$0xff] %v2150
    %2214 = vst [vmem:[#allocation5 + $0x20] sm:$0xff] %v2151
    %2215 = vst [vmem:[#allocation5 + $0x28] sm:$0xff] %v2152
    %2216 = vst.msk [vmem:[#allocation5 + $0x30] sm:$0xff] %vm563, %v2153
    %2217 = vst [vmem:[#allocation5 + $0x38] sm:$0xff] %v2154
    %2218 = vst [vmem:[#allocation5 + $0x40] sm:$0xff] %v2155
    %2219 = vst [vmem:[#allocation5 + $0x48] sm:$0xff] %v2156
    %2220 = vst [vmem:[#allocation5 + $0x50] sm:$0xff] %v2157
    %2221 = vst [vmem:[#allocation5 + $0x58] sm:$0xff] %v2158
    %2222 = vst [vmem:[#allocation5 + $0x60] sm:$0xff] %v2159
    %2223 = vst.msk [vmem:[#allocation5 + $0x68] sm:$0xff] %vm563, %v2160
    %2224 = vst [vmem:[#allocation5 + $0x70] sm:$0xff] %v2161
    %2225 = vst [vmem:[#allocation5 + $0x78] sm:$0xff] %v2162
    %2226 = vst [vmem:[#allocation5 + $0x80] sm:$0xff] %v2163
    %2227 = vst [vmem:[#allocation5 + $0x88] sm:$0xff] %v2164
    %2228 = vst [vmem:[#allocation5 + $0x90] sm:$0xff] %v2165
    %2229 = vst [vmem:[#allocation5 + $0x98] sm:$0xff] %v2166
    %2230 = vst.msk [vmem:[#allocation5 + $0xa0] sm:$0xff] %vm563, %v2167
    %2231 = vst [vmem:[#allocation5 + $0xa8] sm:$0xff] %v2168
    %2232 = vst [vmem:[#allocation5 + $0xb0] sm:$0xff] %v2169
    %2233 = vst [vmem:[#allocation5 + $0xb8] sm:$0xff] %v2170
    %2234 = vst [vmem:[#allocation5 + $0xc0] sm:$0xff] %v2171
    %2235 = vst [vmem:[#allocation5 + $0xc8] sm:$0xff] %v2172
    %2236 = vst [vmem:[#allocation5 + $0xd0] sm:$0xff] %v2173
    %2237 = vst.msk [vmem:[#allocation5 + $0xd8] sm:$0xff] %vm563, %v2174
    %2238 = vst [vmem:[#allocation5 + $0xe0] sm:$0xff] %v2175
    %2239 = vst [vmem:[#allocation5 + $0xe8] sm:$0xff] %v2176
    %2240 = vst [vmem:[#allocation5 + $0xf0] sm:$0xff] %v2177
    %2241 = vst [vmem:[#allocation5 + $0xf8] sm:$0xff] %v2178
    %2242 = vst [vmem:[#allocation5 + $0x100] sm:$0xff] %v2179
    %2243 = vst [vmem:[#allocation5 + $0x108] sm:$0xff] %v2180
    %2244 = vst.msk [vmem:[#allocation5 + $0x110] sm:$0xff] %vm563, %v2181
    %2245 = vst [vmem:[#allocation5 + $0x118] sm:$0xff] %v2182
    %2246 = vst [vmem:[#allocation5 + $0x120] sm:$0xff] %v2183
    %2247 = vst [vmem:[#allocation5 + $0x128] sm:$0xff] %v2184
    %2248 = vst [vmem:[#allocation5 + $0x130] sm:$0xff] %v2185
    %2249 = vst [vmem:[#allocation5 + $0x138] sm:$0xff] %v2186
    %2250 = vst [vmem:[#allocation5 + $0x140] sm:$0xff] %v2187
    %2251 = vst.msk [vmem:[#allocation5 + $0x148] sm:$0xff] %vm563, %v2188
    %2252 = vst [vmem:[#allocation5 + $0x150] sm:$0xff] %v2189
    %2253 = vst [vmem:[#allocation5 + $0x158] sm:$0xff] %v2190
    %2254 = vst [vmem:[#allocation5 + $0x160] sm:$0xff] %v2191
    %2255 = vst [vmem:[#allocation5 + $0x168] sm:$0xff] %v2192
    %2256 = vst [vmem:[#allocation5 + $0x170] sm:$0xff] %v2193
    %2257 = vst [vmem:[#allocation5 + $0x178] sm:$0xff] %v2194
    %2258 = vst.msk [vmem:[#allocation5 + $0x180] sm:$0xff] %vm563, %v2195
    %2259 = vst [vmem:[#allocation5 + $0x188] sm:$0xff] %v2196
    %2260 = vst [vmem:[#allocation5 + $0x190] sm:$0xff] %v2197
    %2261 = vst [vmem:[#allocation5 + $0x198] sm:$0xff] %v2198
    %2262 = vst [vmem:[#allocation5 + $0x1a0] sm:$0xff] %v2199
    %2263 = vst [vmem:[#allocation5 + $0x1a8] sm:$0xff] %v2200
    %2264 = vst [vmem:[#allocation5 + $0x1b0] sm:$0xff] %v2201
    %2265 = vst.msk [vmem:[#allocation5 + $0x1b8] sm:$0xff] %vm563, %v2202
    %2266 = vst [vmem:[#allocation5 + $0x1c0] sm:$0xff] %v2203
    %2267 = vst [vmem:[#allocation5 + $0x1c8] sm:$0xff] %v2204
    %2268 = vst [vmem:[#allocation5 + $0x1d0] sm:$0xff] %v2205
    %2269 = vst [vmem:[#allocation5 + $0x1d8] sm:$0xff] %v2206
    %2270 = vst [vmem:[#allocation5 + $0x1e0] sm:$0xff] %v2207
    %2271 = vst [vmem:[#allocation5 + $0x1e8] sm:$0xff] %v2208
    %2272 = vst.msk [vmem:[#allocation5 + $0x1f0] sm:$0xff] %vm563, %v2209
    %v2273 = vld [vmem:[%s1200] sm:$0xff]
    %v2274 = vld [vmem:[%s1200 + $0x8] sm:$0xff]
    %v2275 = vld [vmem:[%s1200 + $0x10] sm:$0xff]
    %v2276 = vld [vmem:[%s1200 + $0x18] sm:$0xff]
    %v2277 = vld [vmem:[%s1200 + $0x20] sm:$0xff]
    %v2278 = vld [vmem:[%s1200 + $0x28] sm:$0xff]
    %v2279 = vld [vmem:[%s1200 + $0x30] sm:$0xff]
    %v2280 = vld [vmem:[%s1200 + $0x38] sm:$0xff]
    %v2281 = vld [vmem:[%s1200 + $0x40] sm:$0xff]
    %v2282 = vld [vmem:[%s1200 + $0x48] sm:$0xff]
    %v2283 = vld [vmem:[%s1200 + $0x50] sm:$0xff]
    %v2284 = vld [vmem:[%s1200 + $0x58] sm:$0xff]
    %v2285 = vld [vmem:[%s1200 + $0x60] sm:$0xff]
    %v2286 = vld [vmem:[%s1200 + $0x68] sm:$0xff]
    %v2287 = vld [vmem:[%s1200 + $0x70] sm:$0xff]
    %v2288 = vld [vmem:[%s1200 + $0x78] sm:$0xff]
    %v2289 = vld [vmem:[%s1200 + $0x80] sm:$0xff]
    %v2290 = vld [vmem:[%s1200 + $0x88] sm:$0xff]
    %v2291 = vld [vmem:[%s1200 + $0x90] sm:$0xff]
    %v2292 = vld [vmem:[%s1200 + $0x98] sm:$0xff]
    %v2293 = vld [vmem:[%s1200 + $0xa0] sm:$0xff]
    %v2294 = vld [vmem:[%s1200 + $0xa8] sm:$0xff]
    %v2295 = vld [vmem:[%s1200 + $0xb0] sm:$0xff]
    %v2296 = vld [vmem:[%s1200 + $0xb8] sm:$0xff]
    %v2297 = vld [vmem:[%s1200 + $0xc0] sm:$0xff]
    %v2298 = vld [vmem:[%s1200 + $0xc8] sm:$0xff]
    %v2299 = vld [vmem:[%s1200 + $0xd0] sm:$0xff]
    %v2300 = vld [vmem:[%s1200 + $0xd8] sm:$0xff]
    %v2301 = vld [vmem:[%s1200 + $0xe0] sm:$0xff]
    %v2302 = vld [vmem:[%s1200 + $0xe8] sm:$0xff]
    %v2303 = vld [vmem:[%s1200 + $0xf0] sm:$0xff]
    %v2304 = vld [vmem:[%s1200 + $0xf8] sm:$0xff]
    %v2305 = vld [vmem:[%s1200 + $0x100] sm:$0xff]
    %v2306 = vld [vmem:[%s1200 + $0x108] sm:$0xff]
    %v2307 = vld [vmem:[%s1200 + $0x110] sm:$0xff]
    %v2308 = vld [vmem:[%s1200 + $0x118] sm:$0xff]
    %v2309 = vld [vmem:[%s1200 + $0x120] sm:$0xff]
    %v2310 = vld [vmem:[%s1200 + $0x128] sm:$0xff]
    %v2311 = vld [vmem:[%s1200 + $0x130] sm:$0xff]
    %v2312 = vld [vmem:[%s1200 + $0x138] sm:$0xff]
    %v2313 = vld [vmem:[%s1200 + $0x140] sm:$0xff]
    %v2314 = vld [vmem:[%s1200 + $0x148] sm:$0xff]
    %v2315 = vld [vmem:[%s1200 + $0x150] sm:$0xff]
    %v2316 = vld [vmem:[%s1200 + $0x158] sm:$0xff]
    %v2317 = vld [vmem:[%s1200 + $0x160] sm:$0xff]
    %v2318 = vld [vmem:[%s1200 + $0x168] sm:$0xff]
    %v2319 = vld [vmem:[%s1200 + $0x170] sm:$0xff]
    %v2320 = vld [vmem:[%s1200 + $0x178] sm:$0xff]
    %v2321 = vld [vmem:[%s1200 + $0x180] sm:$0xff]
    %v2322 = vld [vmem:[%s1200 + $0x188] sm:$0xff]
    %v2323 = vld [vmem:[%s1200 + $0x190] sm:$0xff]
    %v2324 = vld [vmem:[%s1200 + $0x198] sm:$0xff]
    %v2325 = vld [vmem:[%s1200 + $0x1a0] sm:$0xff]
    %v2326 = vld [vmem:[%s1200 + $0x1a8] sm:$0xff]
    %v2327 = vld [vmem:[%s1200 + $0x1b0] sm:$0xff]
    %v2328 = vld [vmem:[%s1200 + $0x1b8] sm:$0xff]
    %v2329 = vld [vmem:[%s1200 + $0x1c0] sm:$0xff]
    %v2330 = vld [vmem:[%s1200 + $0x1c8] sm:$0xff]
    %v2331 = vld [vmem:[%s1200 + $0x1d0] sm:$0xff]
    %v2332 = vld [vmem:[%s1200 + $0x1d8] sm:$0xff]
    %v2333 = vld [vmem:[%s1200 + $0x1e0] sm:$0xff]
    %v2334 = vld [vmem:[%s1200 + $0x1e8] sm:$0xff]
    %v2335 = vld [vmem:[%s1200 + $0x1f0] sm:$0xff]
    %v2336 = vmul.f32 %v2273, %v1997
    %v2337 = vmul.f32 %v2274, %v1997
    %v2338 = vmul.f32 %v2275, %v1997
    %v2339 = vmul.f32 %v2276, %v1997
    %v2340 = vmul.f32 %v2277, %v1997
    %v2341 = vmul.f32 %v2278, %v1997
    %v2342 = vmul.f32 %v2279, %v1997
    %v2343 = vmul.f32 %v2280, %v2002
    %v2344 = vmul.f32 %v2281, %v2002
    %v2345 = vmul.f32 %v2282, %v2002
    %v2346 = vmul.f32 %v2283, %v2002
    %v2347 = vmul.f32 %v2284, %v2002
    %v2348 = vmul.f32 %v2285, %v2002
    %v2349 = vmul.f32 %v2286, %v2002
    %v2350 = vmul.f32 %v2287, %v2007
    %v2351 = vmul.f32 %v2288, %v2007
    %v2352 = vmul.f32 %v2289, %v2007
    %v2353 = vmul.f32 %v2290, %v2007
    %v2354 = vmul.f32 %v2291, %v2007
    %v2355 = vmul.f32 %v2292, %v2007
    %v2356 = vmul.f32 %v2293, %v2007
    %v2357 = vmul.f32 %v2294, %v2012
    %v2358 = vmul.f32 %v2295, %v2012
    %v2359 = vmul.f32 %v2296, %v2012
    %v2360 = vmul.f32 %v2297, %v2012
    %v2361 = vmul.f32 %v2298, %v2012
    %v2362 = vmul.f32 %v2299, %v2012
    %v2363 = vmul.f32 %v2300, %v2012
    %v2364 = vmul.f32 %v2301, %v2017
    %v2365 = vmul.f32 %v2302, %v2017
    %v2366 = vmul.f32 %v2303, %v2017
    %v2367 = vmul.f32 %v2304, %v2017
    %v2368 = vmul.f32 %v2305, %v2017
    %v2369 = vmul.f32 %v2306, %v2017
    %v2370 = vmul.f32 %v2307, %v2017
    %v2371 = vmul.f32 %v2308, %v2022
    %v2372 = vmul.f32 %v2309, %v2022
    %v2373 = vmul.f32 %v2310, %v2022
    %v2374 = vmul.f32 %v2311, %v2022
    %v2375 = vmul.f32 %v2312, %v2022
    %v2376 = vmul.f32 %v2313, %v2022
    %v2377 = vmul.f32 %v2314, %v2022
    %v2378 = vmul.f32 %v2315, %v2027
    %v2379 = vmul.f32 %v2316, %v2027
    %v2380 = vmul.f32 %v2317, %v2027
    %v2381 = vmul.f32 %v2318, %v2027
    %v2382 = vmul.f32 %v2319, %v2027
    %v2383 = vmul.f32 %v2320, %v2027
    %v2384 = vmul.f32 %v2321, %v2027
    %v2385 = vmul.f32 %v2322, %v2032
    %v2386 = vmul.f32 %v2323, %v2032
    %v2387 = vmul.f32 %v2324, %v2032
    %v2388 = vmul.f32 %v2325, %v2032
    %v2389 = vmul.f32 %v2326, %v2032
    %v2390 = vmul.f32 %v2327, %v2032
    %v2391 = vmul.f32 %v2328, %v2032
    %v2392 = vmul.f32 %v2329, %v2037
    %v2393 = vmul.f32 %v2330, %v2037
    %v2394 = vmul.f32 %v2331, %v2037
    %v2395 = vmul.f32 %v2332, %v2037
    %v2396 = vmul.f32 %v2333, %v2037
    %v2397 = vmul.f32 %v2334, %v2037
    %v2398 = vmul.f32 %v2335, %v2037
    %v2399 = vadd.f32 %v2336, %v2105
    %v2400 = vadd.f32 %v2337, %v2105
    %v2401 = vadd.f32 %v2338, %v2105
    %v2402 = vadd.f32 %v2339, %v2105
    %v2403 = vadd.f32 %v2340, %v2105
    %v2404 = vadd.f32 %v2341, %v2105
    %v2405 = vadd.f32 %v2342, %v2105
    %v2406 = vadd.f32 %v2343, %v2110
    %v2407 = vadd.f32 %v2344, %v2110
    %v2408 = vadd.f32 %v2345, %v2110
    %v2409 = vadd.f32 %v2346, %v2110
    %v2410 = vadd.f32 %v2347, %v2110
    %v2411 = vadd.f32 %v2348, %v2110
    %v2412 = vadd.f32 %v2349, %v2110
    %v2413 = vadd.f32 %v2350, %v2115
    %v2414 = vadd.f32 %v2351, %v2115
    %v2415 = vadd.f32 %v2352, %v2115
    %v2416 = vadd.f32 %v2353, %v2115
    %v2417 = vadd.f32 %v2354, %v2115
    %v2418 = vadd.f32 %v2355, %v2115
    %v2419 = vadd.f32 %v2356, %v2115
    %v2420 = vadd.f32 %v2357, %v2120
    %v2421 = vadd.f32 %v2358, %v2120
    %v2422 = vadd.f32 %v2359, %v2120
    %v2423 = vadd.f32 %v2360, %v2120
    %v2424 = vadd.f32 %v2361, %v2120
    %v2425 = vadd.f32 %v2362, %v2120
    %v2426 = vadd.f32 %v2363, %v2120
    %v2427 = vadd.f32 %v2364, %v2125
    %v2428 = vadd.f32 %v2365, %v2125
    %v2429 = vadd.f32 %v2366, %v2125
    %v2430 = vadd.f32 %v2367, %v2125
    %v2431 = vadd.f32 %v2368, %v2125
    %v2432 = vadd.f32 %v2369, %v2125
    %v2433 = vadd.f32 %v2370, %v2125
    %v2434 = vadd.f32 %v2371, %v2130
    %v2435 = vadd.f32 %v2372, %v2130
    %v2436 = vadd.f32 %v2373, %v2130
    %v2437 = vadd.f32 %v2374, %v2130
    %v2438 = vadd.f32 %v2375, %v2130
    %v2439 = vadd.f32 %v2376, %v2130
    %v2440 = vadd.f32 %v2377, %v2130
    %v2441 = vadd.f32 %v2378, %v2135
    %v2442 = vadd.f32 %v2379, %v2135
    %v2443 = vadd.f32 %v2380, %v2135
    %v2444 = vadd.f32 %v2381, %v2135
    %v2445 = vadd.f32 %v2382, %v2135
    %v2446 = vadd.f32 %v2383, %v2135
    %v2447 = vadd.f32 %v2384, %v2135
    %v2448 = vadd.f32 %v2385, %v2140
    %v2449 = vadd.f32 %v2386, %v2140
    %v2450 = vadd.f32 %v2387, %v2140
    %v2451 = vadd.f32 %v2388, %v2140
    %v2452 = vadd.f32 %v2389, %v2140
    %v2453 = vadd.f32 %v2390, %v2140
    %v2454 = vadd.f32 %v2391, %v2140
    %v2455 = vadd.f32 %v2392, %v2145
    %v2456 = vadd.f32 %v2393, %v2145
    %v2457 = vadd.f32 %v2394, %v2145
    %v2458 = vadd.f32 %v2395, %v2145
    %v2459 = vadd.f32 %v2396, %v2145
    %v2460 = vadd.f32 %v2397, %v2145
    %v2461 = vadd.f32 %v2398, %v2145
    %2462 = vst [vmem:[%s1200] sm:$0xff] %v2399
    %2463 = vst [vmem:[%s1200 + $0x8] sm:$0xff] %v2400
    %2464 = vst [vmem:[%s1200 + $0x10] sm:$0xff] %v2401
    %2465 = vst [vmem:[%s1200 + $0x18] sm:$0xff] %v2402
    %2466 = vst [vmem:[%s1200 + $0x20] sm:$0xff] %v2403
    %2467 = vst [vmem:[%s1200 + $0x28] sm:$0xff] %v2404
    %2468 = vst.msk [vmem:[%s1200 + $0x30] sm:$0xff] %vm563, %v2405
    %2469 = vst [vmem:[%s1200 + $0x38] sm:$0xff] %v2406
    %2470 = vst [vmem:[%s1200 + $0x40] sm:$0xff] %v2407
    %2471 = vst [vmem:[%s1200 + $0x48] sm:$0xff] %v2408
    %2472 = vst [vmem:[%s1200 + $0x50] sm:$0xff] %v2409
    %2473 = vst [vmem:[%s1200 + $0x58] sm:$0xff] %v2410
    %2474 = vst [vmem:[%s1200 + $0x60] sm:$0xff] %v2411
    %2475 = vst.msk [vmem:[%s1200 + $0x68] sm:$0xff] %vm563, %v2412
    %2476 = vst [vmem:[%s1200 + $0x70] sm:$0xff] %v2413
    %2477 = vst [vmem:[%s1200 + $0x78] sm:$0xff] %v2414
    %2478 = vst [vmem:[%s1200 + $0x80] sm:$0xff] %v2415
    %2479 = vst [vmem:[%s1200 + $0x88] sm:$0xff] %v2416
    %2480 = vst [vmem:[%s1200 + $0x90] sm:$0xff] %v2417
    %2481 = vst [vmem:[%s1200 + $0x98] sm:$0xff] %v2418
    %2482 = vst.msk [vmem:[%s1200 + $0xa0] sm:$0xff] %vm563, %v2419
    %2483 = vst [vmem:[%s1200 + $0xa8] sm:$0xff] %v2420
    %2484 = vst [vmem:[%s1200 + $0xb0] sm:$0xff] %v2421
    %2485 = vst [vmem:[%s1200 + $0xb8] sm:$0xff] %v2422
    %2486 = vst [vmem:[%s1200 + $0xc0] sm:$0xff] %v2423
    %2487 = vst [vmem:[%s1200 + $0xc8] sm:$0xff] %v2424
    %2488 = vst [vmem:[%s1200 + $0xd0] sm:$0xff] %v2425
    %2489 = vst.msk [vmem:[%s1200 + $0xd8] sm:$0xff] %vm563, %v2426
    %2490 = vst [vmem:[%s1200 + $0xe0] sm:$0xff] %v2427
    %2491 = vst [vmem:[%s1200 + $0xe8] sm:$0xff] %v2428
    %2492 = vst [vmem:[%s1200 + $0xf0] sm:$0xff] %v2429
    %2493 = vst [vmem:[%s1200 + $0xf8] sm:$0xff] %v2430
    %2494 = vst [vmem:[%s1200 + $0x100] sm:$0xff] %v2431
    %2495 = vst [vmem:[%s1200 + $0x108] sm:$0xff] %v2432
    %2496 = vst.msk [vmem:[%s1200 + $0x110] sm:$0xff] %vm563, %v2433
    %2497 = vst [vmem:[%s1200 + $0x118] sm:$0xff] %v2434
    %2498 = vst [vmem:[%s1200 + $0x120] sm:$0xff] %v2435
    %2499 = vst [vmem:[%s1200 + $0x128] sm:$0xff] %v2436
    %2500 = vst [vmem:[%s1200 + $0x130] sm:$0xff] %v2437
    %2501 = vst [vmem:[%s1200 + $0x138] sm:$0xff] %v2438
    %2502 = vst [vmem:[%s1200 + $0x140] sm:$0xff] %v2439
    %2503 = vst.msk [vmem:[%s1200 + $0x148] sm:$0xff] %vm563, %v2440
    %2504 = vst [vmem:[%s1200 + $0x150] sm:$0xff] %v2441
    %2505 = vst [vmem:[%s1200 + $0x158] sm:$0xff] %v2442
    %2506 = vst [vmem:[%s1200 + $0x160] sm:$0xff] %v2443
    %2507 = vst [vmem:[%s1200 + $0x168] sm:$0xff] %v2444
    %2508 = vst [vmem:[%s1200 + $0x170] sm:$0xff] %v2445
    %2509 = vst [vmem:[%s1200 + $0x178] sm:$0xff] %v2446
    %2510 = vst.msk [vmem:[%s1200 + $0x180] sm:$0xff] %vm563, %v2447
    %2511 = vst [vmem:[%s1200 + $0x188] sm:$0xff] %v2448
    %2512 = vst [vmem:[%s1200 + $0x190] sm:$0xff] %v2449
    %2513 = vst [vmem:[%s1200 + $0x198] sm:$0xff] %v2450
    %2514 = vst [vmem:[%s1200 + $0x1a0] sm:$0xff] %v2451
    %2515 = vst [vmem:[%s1200 + $0x1a8] sm:$0xff] %v2452
    %2516 = vst [vmem:[%s1200 + $0x1b0] sm:$0xff] %v2453
    %2517 = vst.msk [vmem:[%s1200 + $0x1b8] sm:$0xff] %vm563, %v2454
    %2518 = vst [vmem:[%s1200 + $0x1c0] sm:$0xff] %v2455
    %2519 = vst [vmem:[%s1200 + $0x1c8] sm:$0xff] %v2456
    %2520 = vst [vmem:[%s1200 + $0x1d0] sm:$0xff] %v2457
    %2521 = vst [vmem:[%s1200 + $0x1d8] sm:$0xff] %v2458
    %2522 = vst [vmem:[%s1200 + $0x1e0] sm:$0xff] %v2459
    %2523 = vst [vmem:[%s1200 + $0x1e8] sm:$0xff] %v2460
    %2524 = vst.msk [vmem:[%s1200 + $0x1f0] sm:$0xff] %vm563, %v2461
    // Predicated region
    $region22: #{tpu_custom_call.1} parent=1 // pred_check
      _
    $region23: #{tpu_custom_call.1} parent=1 // pred_check_branch
      %2526 = sbr.rel (0) target = $region25
    $region24: #{tpu_custom_call.1} parent=1 // pred_region
      %s2528 = ssub.s32 16128, 16128
      %2529 = vsyncadd [#allocation4], %s2528
      %s2530 = sshll.u32 [#allocation5], 4
      %s2531 = int_to_ptr.vmem [resolvable:$true] %s2530
      %2536 = dma.vmem_to_hbm [thread:$0]  %s2531, 16128, %s4, [#allocation4], 896, 896, 56
    $region25: #{tpu_custom_call.1} parent=1 // pred_fallthru
      _
    // Predicated region
    $region26: #{tpu_custom_call.1} parent=1 // pred_check
      _
    $region27: #{tpu_custom_call.1} parent=1 // pred_check_branch
      %2538 = sbr.rel (0) target = $region29
    $region28: #{tpu_custom_call.1} parent=1 // pred_region
      %2539 = dma.done [#allocation4], 16128
    $region29: #{tpu_custom_call.1} parent=1 // pred_fallthru
      _
    %2540 = vsyncpa [#allocation3], 1
    %2541 = vsyncpa [#allocation4], 1

</llo_original>
